<compile_context>
chip_gen: v6e
topology: v6e:2x2x1
jax: 0.10.0
libtpu: 0.0.40
codegen_flags: <defaults>
</compile_context>

<pallas_src>
import jax
import jax.numpy as jnp
from jax.experimental import pallas as pl
from jax.experimental.pallas import tpu as pltpu


# ------------------------- Pallas kernel ------------------------------------


def _ff_kernel(x_ref,
               w1_ref, b1_ref,
               w3_ref, b3_ref,
               w4_ref, b4_ref,
               w5_ref, b5_ref,
               w6_ref, b6_ref,
               w7_ref, b7_ref,
               o_ref):
    """Fused 6-layer MLP with ReLU after every linear layer.

    The whole batch tile lives in VMEM; every matmul runs on the MXU with
    bf16 operands and an f32 accumulator.  x arrives as f32 and is cast to
    the weight dtype in-vreg (VPU cast is free under DMA slack).
    """

    def layer(h, w_ref, b_ref, *, keep_f32=False):
        y = jnp.dot(h, w_ref[...], preferred_element_type=jnp.float32)
        y = jnp.maximum(y + b_ref[...], 0.0)   # bias + ReLU; dropout(eval)==id
        # Cast activations back to the weight dtype so the next matmul gets
        # bf16 operands (f32 accumulation keeps accuracy).
        return y if keep_f32 else y.astype(w_ref.dtype)

    h = x_ref[...].astype(w1_ref.dtype)              # (tile, in)  f32 -> bf16
    h = layer(h, w1_ref, b1_ref)                     # (tile, 256)
    h = layer(h, w3_ref, b3_ref)                     # (tile, 128)
    h = layer(h, w4_ref, b4_ref)                     # (tile, 128)
    h = layer(h, w5_ref, b5_ref)                     # (tile, 128)
    h = layer(h, w6_ref, b6_ref)                     # (tile, 128)
    h = layer(h, w7_ref, b7_ref, keep_f32=True)      # (tile, 1)   f32

    # Lane-dense store: (tile, 1) -> (1, tile) transpose uses the (otherwise
    # idle) XLU slot and turns a masked 1-lane store into full-width stores.
    # (If a bundle dump on v5e ever shows this on the critical path at very
    #  large tiles, fall back to a plain (tile, 1) masked-store layout.)
    o_ref[...] = h.T.astype(o_ref.dtype)


# ------------------------- helpers ------------------------------------------


def _round_up(n, m):
    return (n + m - 1) // m * m


def _num_tensorcores():
    """2 TensorCores per chip on v7x-class devices, 1 on v5e/v6e."""
    try:
        kind = jax.devices()[0].device_kind.lower()
    except Exception:
        return 1
    return 2 if "7" in kind else 1


def _choose_tiling(B, batch_tile_cap, num_tc):
    """Pick (tile, num_tiles, B_pad): 128-aligned, balanced tiles, >= num_tc
    tiles when the batch is big enough so the 'parallel' axis can shard."""
    B_pad = _round_up(max(B, 1), 128)
    cap = _round_up(max(batch_tile_cap, 128), 128)
    num_tiles = pl.cdiv(B_pad, cap)
    if num_tc > 1 and B_pad >= num_tc * 128:
        num_tiles = max(num_tiles, num_tc)        # keep both v7x TCs busy
    tile = _round_up(pl.cdiv(B_pad, num_tiles), 128)
    B_pad = num_tiles * tile
    return tile, num_tiles, B_pad


# ------------------------- wrapper ------------------------------------------


def feedforward(x, params, *, batch_tile=4096, compute_dtype=jnp.bfloat16):
    """x: (B, input_size) float32.  params: dict name -> (w, b).

    Weights are stored (in_features, out_features); biases (1, out_features).
    Returns (B, 1) float32, matching the PyTorch module's eval-mode forward.
    """
    B, f_in = x.shape
    names = ["fc1", "fc3", "fc4", "fc5", "fc6", "fc7"]

    # ---- weight prep: bf16 MXU operands, hidden dims zero-padded to 128 ----
    # (exact: padded activation columns are relu(0 + 0) == 0 and hit zero
    #  weight rows in the next layer).  Last layer's output dim stays 1.
    weights = []
    prev = f_in                                  # x itself is NOT padded
    for i, name in enumerate(names):
        w, b = params[name]
        d_in, d_out = w.shape
        d_out_p = d_out if i == len(names) - 1 else _round_up(d_out, 128)
        w_p = jnp.zeros((prev, d_out_p), compute_dtype)
        w_p = w_p.at[:d_in, :d_out].set(w.astype(compute_dtype))
        b_p = jnp.zeros((1, d_out_p), jnp.float32)
        b_p = b_p.at[:, :d_out].set(b.astype(jnp.float32))
        weights += [w_p, b_p]
        prev = d_out_p

    # ---- batch tiling: big, balanced, 128-aligned tiles ---------------------
    tile, num_tiles, B_pad = _choose_tiling(B, batch_tile, _num_tensorcores())

    # x stays float32 (cast happens inside the kernel).  Only the ragged tail
    # is zero-padded; at nice batch sizes (multiples of 128) this is a no-op.
    x_p = x
    if B_pad != B:
        x_p = jnp.pad(x, ((0, B_pad - B), (0, 0)))

    def resident(arr):
        # Whole array resident in VMEM; constant block index -> DMA'd once.
        return pl.BlockSpec(arr.shape, lambda i: (0,) * arr.ndim)

    in_specs = [pl.BlockSpec((tile, f_in), lambda i: (i, 0))]
    in_specs += [resident(p) for p in weights]

    # Lane-dense output: one (1, tile) slab per grid step, tile % 128 == 0.
    out_spec = pl.BlockSpec((1, tile), lambda i: (0, i))

    out = pl.pallas_call(
        _ff_kernel,
        out_shape=jax.ShapeDtypeStruct((1, B_pad), jnp.float32),
        grid_spec=pltpu.PrefetchScalarGridSpec(
            num_scalar_prefetch=0,
            grid=(num_tiles,),
            in_specs=in_specs,
            out_specs=out_spec,
        ),
        # VMEM/step at tile=4096: x (512 KiB f32, double-buffered) + ~200 KiB
        # resident weights + <8 MiB f32/bf16 activations -- well inside every
        # generation's scoped default (incl. v7x), so no vmem_limit_bytes
        # override needed.  If exposed DMA ever shows at step boundaries,
        # bump in_specs[0] to pipeline_mode=pl.Buffered(3).
        compiler_params=pltpu.CompilerParams(
            dimension_semantics=("parallel",)),     # megacore sharding on v7x
    )(x_p, *weights)

    # Padded rows carry relu(bias)-propagated junk in the padded region of the
    # (1, B_pad) buffer; it is sliced off here.
    return out[0, :B].reshape(B, 1).astype(jnp.float32)


# ------------------------- parameter init -----------------------------------


def init_params(key, input_size):
    """Init mimicking nn.Linear default (uniform +/- 1/sqrt(fan_in)).

    Weights stored as (in_features, out_features); biases as (1, out)."""
    dims = [(input_size, 200), (200, 100), (100, 100),
            (100, 50), (50, 20), (20, 1)]
    names = ["fc1", "fc3", "fc4", "fc5", "fc6", "fc7"]
    params = {}
    for name, (fan_in, fan_out) in zip(names, dims):
        key, kw, kb = jax.random.split(key, 3)
        bound = 1.0 / jnp.sqrt(fan_in)
        w = jax.random.uniform(kw, (fan_in, fan_out), jnp.float32,
                               minval=-bound, maxval=bound)
        b = jax.random.uniform(kb, (1, fan_out), jnp.float32,
                               minval=-bound, maxval=bound)
        params[name] = (w, b)
    return params


def feedforward_ref(x, params, compute_dtype=jnp.bfloat16):
    """Pure-JAX reference.  With compute_dtype=bf16 it follows the kernel's
    dtype path (bf16 operands, f32 accumulation/bias, bf16 inter-layer cast);
    with float32 it is a full-precision reference."""
    names = ["fc1", "fc3", "fc4", "fc5", "fc6", "fc7"]
    h = x.astype(compute_dtype)
    y = None
    for name in names:
        w, b = params[name]
        y = jnp.dot(h, w.astype(compute_dtype),
                    preferred_element_type=jnp.float32)
        y = jnp.maximum(y + b.astype(jnp.float32), 0.0)
        h = y.astype(compute_dtype)
    return y  # last layer's f32 activations, shape (B, 1)


# ------------------------- main ----------------------------------------------

if __name__ == "__main__":
    key = jax.random.PRNGKey(0)
    batch, input_size = 8, 32

    kx, kp = jax.random.split(key)
    x = jax.random.normal(kx, (batch, input_size), jnp.float32)
    params = init_params(kp, input_size)

    out = jax.block_until_ready(feedforward(x, params))

    ref_same_path = feedforward_ref(x, params)                         # bf16 path
    ref_f32 = feedforward_ref(x, params, compute_dtype=jnp.float32)    # full f32

    assert out.shape == (batch, 1)
    assert out.dtype == jnp.float32
    assert jnp.allclose(out, ref_same_path, atol=1e-3, rtol=1e-3), \
        "mismatch vs same-dtype-path reference"
    assert jnp.allclose(out, ref_f32, atol=5e-2, rtol=5e-2), \
        "mismatch vs float32 reference (bf16 drift too large)"

    print("KERNEL_OK")
</pallas_src>

<mosaic_0001>
module attributes {stable_mosaic.version = 11 : i64} {
  func.func @_ff_kernel(%arg0: i32, %arg1: memref<128x32xf32, #tpu.memory_space<vmem>>, %arg2: memref<32x256xbf16, #tpu.memory_space<vmem>>, %arg3: memref<1x256xf32, #tpu.memory_space<vmem>>, %arg4: memref<256x128xbf16, #tpu.memory_space<vmem>>, %arg5: memref<1x128xf32, #tpu.memory_space<vmem>>, %arg6: memref<128x128xbf16, #tpu.memory_space<vmem>>, %arg7: memref<1x128xf32, #tpu.memory_space<vmem>>, %arg8: memref<128x128xbf16, #tpu.memory_space<vmem>>, %arg9: memref<1x128xf32, #tpu.memory_space<vmem>>, %arg10: memref<128x128xbf16, #tpu.memory_space<vmem>>, %arg11: memref<1x128xf32, #tpu.memory_space<vmem>>, %arg12: memref<128x1xbf16, #tpu.memory_space<vmem>>, %arg13: memref<1x1xf32, #tpu.memory_space<vmem>>, %arg14: memref<1x128xf32, #tpu.memory_space<vmem>>) attributes {dimension_semantics = [#tpu.dimension_semantics<parallel>], iteration_bounds = array<i64: 1>, scalar_prefetch = 0 : i64, scratch_operands = 0 : i64, tpu.core_type = #tpu.core_type<tc>, window_params = [{transform_indices = @transform_0, window_bounds = array<i64: 128, 32>}, {pipeline_mode = #tpu.pipeline_mode<synchronous>, transform_indices = @transform_1, window_bounds = array<i64: 32, 256>}, {pipeline_mode = #tpu.pipeline_mode<synchronous>, transform_indices = @transform_2, window_bounds = array<i64: 1, 256>}, {pipeline_mode = #tpu.pipeline_mode<synchronous>, transform_indices = @transform_3, window_bounds = array<i64: 256, 128>}, {pipeline_mode = #tpu.pipeline_mode<synchronous>, transform_indices = @transform_4, window_bounds = array<i64: 1, 128>}, {pipeline_mode = #tpu.pipeline_mode<synchronous>, transform_indices = @transform_5, window_bounds = array<i64: 128, 128>}, {pipeline_mode = #tpu.pipeline_mode<synchronous>, transform_indices = @transform_6, window_bounds = array<i64: 1, 128>}, {pipeline_mode = #tpu.pipeline_mode<synchronous>, transform_indices = @transform_7, window_bounds = array<i64: 128, 128>}, {pipeline_mode = #tpu.pipeline_mode<synchronous>, transform_indices = @transform_8, window_bounds = array<i64: 1, 128>}, {pipeline_mode = #tpu.pipeline_mode<synchronous>, transform_indices = @transform_9, window_bounds = array<i64: 128, 128>}, {pipeline_mode = #tpu.pipeline_mode<synchronous>, transform_indices = @transform_10, window_bounds = array<i64: 1, 128>}, {pipeline_mode = #tpu.pipeline_mode<synchronous>, transform_indices = @transform_11, window_bounds = array<i64: 128, 1>}, {pipeline_mode = #tpu.pipeline_mode<synchronous>, transform_indices = @transform_12, window_bounds = array<i64: 1, 1>}, {transform_indices = @transform_13, window_bounds = array<i64: 1, 128>}]} {
    %c0 = arith.constant 0 : index
    %c0_0 = arith.constant 0 : index
    %0 = vector.load %arg1[%c0, %c0_0] : memref<128x32xf32, #tpu.memory_space<vmem>>, vector<128x32xf32>
    %1 = arith.truncf %0 : vector<128x32xf32> to vector<128x32xbf16>
    %c0_1 = arith.constant 0 : index
    %c0_2 = arith.constant 0 : index
    %2 = vector.load %arg2[%c0_1, %c0_2] : memref<32x256xbf16, #tpu.memory_space<vmem>>, vector<32x256xbf16>
    %cst = arith.constant dense<0.000000e+00> : vector<128x256xf32>
    %3 = tpu.matmul %1, %2, %cst {dimension_numbers = #tpu.dot_dimension_numbers<[1], [0], [0], [1], [0, 0, 1, 1], [], []>} : vector<128x32xbf16>, vector<32x256xbf16>, vector<128x256xf32> -> vector<128x256xf32>
    %c0_3 = arith.constant 0 : index
    %c0_4 = arith.constant 0 : index
    %4 = vector.load %arg3[%c0_3, %c0_4] : memref<1x256xf32, #tpu.memory_space<vmem>>, vector<1x256xf32>
    %5 = vector.broadcast %4 : vector<1x256xf32> to vector<128x256xf32>
    %6 = arith.addf %3, %5 : vector<128x256xf32>
    %cst_5 = arith.constant 0.000000e+00 : f32
    %7 = vector.broadcast %cst_5 : f32 to vector<128x256xf32>
    %8 = arith.maximumf %6, %7 : vector<128x256xf32>
    %9 = arith.truncf %8 : vector<128x256xf32> to vector<128x256xbf16>
    %c0_6 = arith.constant 0 : index
    %c0_7 = arith.constant 0 : index
    %10 = vector.load %arg4[%c0_6, %c0_7] : memref<256x128xbf16, #tpu.memory_space<vmem>>, vector<256x128xbf16>
    %cst_8 = arith.constant dense<0.000000e+00> : vector<128x128xf32>
    %11 = tpu.matmul %9, %10, %cst_8 {dimension_numbers = #tpu.dot_dimension_numbers<[1], [0], [0], [1], [0, 0, 1, 1], [], []>} : vector<128x256xbf16>, vector<256x128xbf16>, vector<128x128xf32> -> vector<128x128xf32>
    %c0_9 = arith.constant 0 : index
    %c0_10 = arith.constant 0 : index
    %12 = vector.load %arg5[%c0_9, %c0_10] : memref<1x128xf32, #tpu.memory_space<vmem>>, vector<1x128xf32>
    %13 = vector.broadcast %12 : vector<1x128xf32> to vector<128x128xf32>
    %14 = arith.addf %11, %13 : vector<128x128xf32>
    %cst_11 = arith.constant 0.000000e+00 : f32
    %15 = vector.broadcast %cst_11 : f32 to vector<128x128xf32>
    %16 = arith.maximumf %14, %15 : vector<128x128xf32>
    %17 = arith.truncf %16 : vector<128x128xf32> to vector<128x128xbf16>
    %c0_12 = arith.constant 0 : index
    %c0_13 = arith.constant 0 : index
    %18 = vector.load %arg6[%c0_12, %c0_13] : memref<128x128xbf16, #tpu.memory_space<vmem>>, vector<128x128xbf16>
    %cst_14 = arith.constant dense<0.000000e+00> : vector<128x128xf32>
    %19 = tpu.matmul %17, %18, %cst_14 {dimension_numbers = #tpu.dot_dimension_numbers<[1], [0], [0], [1], [0, 0, 1, 1], [], []>} : vector<128x128xbf16>, vector<128x128xbf16>, vector<128x128xf32> -> vector<128x128xf32>
    %c0_15 = arith.constant 0 : index
    %c0_16 = arith.constant 0 : index
    %20 = vector.load %arg7[%c0_15, %c0_16] : memref<1x128xf32, #tpu.memory_space<vmem>>, vector<1x128xf32>
    %21 = vector.broadcast %20 : vector<1x128xf32> to vector<128x128xf32>
    %22 = arith.addf %19, %21 : vector<128x128xf32>
    %cst_17 = arith.constant 0.000000e+00 : f32
    %23 = vector.broadcast %cst_17 : f32 to vector<128x128xf32>
    %24 = arith.maximumf %22, %23 : vector<128x128xf32>
    %25 = arith.truncf %24 : vector<128x128xf32> to vector<128x128xbf16>
    %c0_18 = arith.constant 0 : index
    %c0_19 = arith.constant 0 : index
    %26 = vector.load %arg8[%c0_18, %c0_19] : memref<128x128xbf16, #tpu.memory_space<vmem>>, vector<128x128xbf16>
    %cst_20 = arith.constant dense<0.000000e+00> : vector<128x128xf32>
    %27 = tpu.matmul %25, %26, %cst_20 {dimension_numbers = #tpu.dot_dimension_numbers<[1], [0], [0], [1], [0, 0, 1, 1], [], []>} : vector<128x128xbf16>, vector<128x128xbf16>, vector<128x128xf32> -> vector<128x128xf32>
    %c0_21 = arith.constant 0 : index
    %c0_22 = arith.constant 0 : index
    %28 = vector.load %arg9[%c0_21, %c0_22] : memref<1x128xf32, #tpu.memory_space<vmem>>, vector<1x128xf32>
    %29 = vector.broadcast %28 : vector<1x128xf32> to vector<128x128xf32>
    %30 = arith.addf %27, %29 : vector<128x128xf32>
    %cst_23 = arith.constant 0.000000e+00 : f32
    %31 = vector.broadcast %cst_23 : f32 to vector<128x128xf32>
    %32 = arith.maximumf %30, %31 : vector<128x128xf32>
    %33 = arith.truncf %32 : vector<128x128xf32> to vector<128x128xbf16>
    %c0_24 = arith.constant 0 : index
    %c0_25 = arith.constant 0 : index
    %34 = vector.load %arg10[%c0_24, %c0_25] : memref<128x128xbf16, #tpu.memory_space<vmem>>, vector<128x128xbf16>
    %cst_26 = arith.constant dense<0.000000e+00> : vector<128x128xf32>
    %35 = tpu.matmul %33, %34, %cst_26 {dimension_numbers = #tpu.dot_dimension_numbers<[1], [0], [0], [1], [0, 0, 1, 1], [], []>} : vector<128x128xbf16>, vector<128x128xbf16>, vector<128x128xf32> -> vector<128x128xf32>
    %c0_27 = arith.constant 0 : index
    %c0_28 = arith.constant 0 : index
    %36 = vector.load %arg11[%c0_27, %c0_28] : memref<1x128xf32, #tpu.memory_space<vmem>>, vector<1x128xf32>
    %37 = vector.broadcast %36 : vector<1x128xf32> to vector<128x128xf32>
    %38 = arith.addf %35, %37 : vector<128x128xf32>
    %cst_29 = arith.constant 0.000000e+00 : f32
    %39 = vector.broadcast %cst_29 : f32 to vector<128x128xf32>
    %40 = arith.maximumf %38, %39 : vector<128x128xf32>
    %41 = arith.truncf %40 : vector<128x128xf32> to vector<128x128xbf16>
    %c0_30 = arith.constant 0 : index
    %c0_31 = arith.constant 0 : index
    %42 = vector.load %arg12[%c0_30, %c0_31] : memref<128x1xbf16, #tpu.memory_space<vmem>>, vector<128x1xbf16>
    %cst_32 = arith.constant dense<0.000000e+00> : vector<128x1xf32>
    %43 = tpu.matmul %41, %42, %cst_32 {dimension_numbers = #tpu.dot_dimension_numbers<[1], [0], [0], [1], [0, 0, 1, 1], [], []>} : vector<128x128xbf16>, vector<128x1xbf16>, vector<128x1xf32> -> vector<128x1xf32>
    %c0_33 = arith.constant 0 : index
    %c0_34 = arith.constant 0 : index
    %44 = vector.load %arg13[%c0_33, %c0_34] : memref<1x1xf32, #tpu.memory_space<vmem>>, vector<1x1xf32>
    %45 = vector.broadcast %44 : vector<1x1xf32> to vector<128x1xf32>
    %46 = arith.addf %43, %45 : vector<128x1xf32>
    %cst_35 = arith.constant 0.000000e+00 : f32
    %47 = vector.broadcast %cst_35 : f32 to vector<128x1xf32>
    %48 = arith.maximumf %46, %47 : vector<128x1xf32>
    %49 = tpu.transpose %48, [1, 0] : vector<128x1xf32> -> vector<1x128xf32>
    %c0_36 = arith.constant 0 : index
    %c0_37 = arith.constant 0 : index
    %50 = vector.load %arg14[%c0_36, %c0_37] : memref<1x128xf32, #tpu.memory_space<vmem>>, vector<1x128xf32>
    tpu.vector_store %arg14[%c0_36, %c0_37], %49 {strides = array<i32>} : memref<1x128xf32, #tpu.memory_space<vmem>>, vector<1x128xf32>,
    return
  }
  func.func @transform_0(%arg0: i32) -> (i32, i32) {
    %c0_i32 = arith.constant 0 : i32
    %c0_i32_0 = arith.constant 0 : i32
    return %arg0, %c0_i32 : i32, i32
  }
  func.func @transform_1(%arg0: i32) -> (i32, i32) {
    %c0_i32 = arith.constant 0 : i32
    %c0_i32_0 = arith.constant 0 : i32
    %c0_i32_1 = arith.constant 0 : i32
    return %c0_i32, %c0_i32_0 : i32, i32
  }
  func.func @transform_2(%arg0: i32) -> (i32, i32) {
    %c0_i32 = arith.constant 0 : i32
    %c0_i32_0 = arith.constant 0 : i32
    %c0_i32_1 = arith.constant 0 : i32
    return %c0_i32, %c0_i32_0 : i32, i32
  }
  func.func @transform_3(%arg0: i32) -> (i32, i32) {
    %c0_i32 = arith.constant 0 : i32
    %c0_i32_0 = arith.constant 0 : i32
    %c0_i32_1 = arith.constant 0 : i32
    return %c0_i32, %c0_i32_0 : i32, i32
  }
  func.func @transform_4(%arg0: i32) -> (i32, i32) {
    %c0_i32 = arith.constant 0 : i32
    %c0_i32_0 = arith.constant 0 : i32
    %c0_i32_1 = arith.constant 0 : i32
    return %c0_i32, %c0_i32_0 : i32, i32
  }
  func.func @transform_5(%arg0: i32) -> (i32, i32) {
    %c0_i32 = arith.constant 0 : i32
    %c0_i32_0 = arith.constant 0 : i32
    %c0_i32_1 = arith.constant 0 : i32
    return %c0_i32, %c0_i32_0 : i32, i32
  }
  func.func @transform_6(%arg0: i32) -> (i32, i32) {
    %c0_i32 = arith.constant 0 : i32
    %c0_i32_0 = arith.constant 0 : i32
    %c0_i32_1 = arith.constant 0 : i32
    return %c0_i32, %c0_i32_0 : i32, i32
  }
  func.func @transform_7(%arg0: i32) -> (i32, i32) {
    %c0_i32 = arith.constant 0 : i32
    %c0_i32_0 = arith.constant 0 : i32
    %c0_i32_1 = arith.constant 0 : i32
    return %c0_i32, %c0_i32_0 : i32, i32
  }
  func.func @transform_8(%arg0: i32) -> (i32, i32) {
    %c0_i32 = arith.constant 0 : i32
    %c0_i32_0 = arith.constant 0 : i32
    %c0_i32_1 = arith.constant 0 : i32
    return %c0_i32, %c0_i32_0 : i32, i32
  }
  func.func @transform_9(%arg0: i32) -> (i32, i32) {
    %c0_i32 = arith.constant 0 : i32
    %c0_i32_0 = arith.constant 0 : i32
    %c0_i32_1 = arith.constant 0 : i32
    return %c0_i32, %c0_i32_0 : i32, i32
  }
  func.func @transform_10(%arg0: i32) -> (i32, i32) {
    %c0_i32 = arith.constant 0 : i32
    %c0_i32_0 = arith.constant 0 : i32
    %c0_i32_1 = arith.constant 0 : i32
    return %c0_i32, %c0_i32_0 : i32, i32
  }
  func.func @transform_11(%arg0: i32) -> (i32, i32) {
    %c0_i32 = arith.constant 0 : i32
    %c0_i32_0 = arith.constant 0 : i32
    %c0_i32_1 = arith.constant 0 : i32
    return %c0_i32, %c0_i32_0 : i32, i32
  }
  func.func @transform_12(%arg0: i32) -> (i32, i32) {
    %c0_i32 = arith.constant 0 : i32
    %c0_i32_0 = arith.constant 0 : i32
    %c0_i32_1 = arith.constant 0 : i32
    return %c0_i32, %c0_i32_0 : i32, i32
  }
  func.func @transform_13(%arg0: i32) -> (i32, i32) {
    %c0_i32 = arith.constant 0 : i32
    %c0_i32_0 = arith.constant 0 : i32
    return %c0_i32, %arg0 : i32, i32
  }
}

</mosaic_0001>

<llo_original>
// kernel: tpu_custom_call.1
$region0: #{tpu_custom_call.1}
  #allocation0 [shape = 'u32[]', space=smem, size = 0x4, offset = 0x4, fixed_abs, tag = 'smem constant byte address 0x4 - core index']
  #allocation1 [shape = 'u32[144,128]{1,0:T(1,128)}', space=vmem, size = 0x12000, scoped, tag = 'internal scratch']
  #allocation2 [shape = 'f32[1,1]{1,0:T(1,128)S(1)}', space=vmem, size = 0x200, scoped, tag = 'scoped memory for tpu_custom_call.1']
  %s0 = inlined_call_operand.vmem [shape: f32[128,32], index: 0, kind: input, shape index: {}]
  %s1 = inlined_call_operand.vmem [shape: bf16[32,256], index: 1, kind: input, shape index: {}]
  %s2 = inlined_call_operand.vmem [shape: f32[1,256], index: 2, kind: input, shape index: {}]
  %s3 = inlined_call_operand.vmem [shape: bf16[256,128], index: 3, kind: input, shape index: {}]
  %s4 = inlined_call_operand.vmem [shape: f32[1,128], index: 4, kind: input, shape index: {}]
  %s5 = inlined_call_operand.vmem [shape: bf16[128,128], index: 5, kind: input, shape index: {}]
  %s6 = inlined_call_operand.vmem [shape: f32[1,128], index: 6, kind: input, shape index: {}]
  %s7 = inlined_call_operand.hbm [shape: bf16[128,128], index: 7, kind: input, shape index: {}]
  %s8 = inlined_call_operand.vmem [shape: f32[1,128], index: 8, kind: input, shape index: {}]
  %s9 = inlined_call_operand.hbm [shape: bf16[128,128], index: 9, kind: input, shape index: {}]
  %s10 = inlined_call_operand.vmem [shape: f32[1,128], index: 10, kind: input, shape index: {}]
  %s11 = inlined_call_operand.vmem [shape: bf16[128,1], index: 11, kind: input, shape index: {}]
  %s12 = inlined_call_operand.<no memory space> [shape: f32[1,1], index: 12, kind: input, shape index: {}]
  %s13 = inlined_call_operand.hbm [shape: f32[1,128], index: 13, kind: output, shape index: {}]
  %s14 = sld [smem:[#allocation0]]
  $region70: #{tpu_custom_call.1} parent=0
    _
  %s16 = ssub.s32 1, %s14
  %s17 = scalar_select 0, %s16, %s14
  %v18 = vstv %s12
  %19 = vst [vmem:[#allocation2] sm:$0x1] %v18
  $region1: #{tpu_custom_call.1} parent=0
    #allocation3 [shape = 'u8[32768]{0}', space=vmem, size = 0x8000, scoped, tag = 'input window, operand 7, single buffered']
    #allocation4 [shape = 's32[1]{0}', space=sflag, size = 0x4, scoped, tag = 'scoped memory for tpu_custom_call.1']
    #allocation5 [shape = 's32[1]{0}', space=sflag, size = 0x4, scoped, tag = 'scoped memory for tpu_custom_call.1']
    #allocation6 [shape = 'u8[32768]{0}', space=vmem, size = 0x8000, scoped, tag = 'input window, operand 9, single buffered']
    #allocation7 [shape = 's32[1]{0}', space=sflag, size = 0x4, scoped, tag = 'scoped memory for tpu_custom_call.1']
    #allocation8 [shape = 'u8[512]{0}', space=vmem, size = 0x400, scoped, tag = 'output window, operand 0, single buffered']
    %20 = vsyncpa [#allocation4], 0
    %21 = vsyncpa [#allocation7], 0
    %22 = vsyncpa [#allocation5], 0
    // Predicated region
    $region2: #{tpu_custom_call.1} parent=1 // pred_check
      _
    $region3: #{tpu_custom_call.1} parent=1 // pred_check_branch
      %24 = sbr.rel (0) target = $region5
    $region4: #{tpu_custom_call.1} parent=1 // pred_region
      _
    $region5: #{tpu_custom_call.1} parent=1 // pred_fallthru
      _
    // Predicated region
    $region6: #{tpu_custom_call.1} parent=1 // pred_check
      _
    $region7: #{tpu_custom_call.1} parent=1 // pred_check_branch
      %26 = sbr.rel (0) target = $region9
    $region8: #{tpu_custom_call.1} parent=1 // pred_region
      _
    $region9: #{tpu_custom_call.1} parent=1 // pred_fallthru
      _
    // Predicated region
    $region10: #{tpu_custom_call.1} parent=1 // pred_check
      _
    $region11: #{tpu_custom_call.1} parent=1 // pred_check_branch
      %28 = sbr.rel (0) target = $region13
    $region12: #{tpu_custom_call.1} parent=1 // pred_region
      _
    $region13: #{tpu_custom_call.1} parent=1 // pred_fallthru
      _
    // Predicated region
    $region14: #{tpu_custom_call.1} parent=1 // pred_check
      _
    $region15: #{tpu_custom_call.1} parent=1 // pred_check_branch
      %30 = sbr.rel (0) target = $region17
    $region16: #{tpu_custom_call.1} parent=1 // pred_region
      _
    $region17: #{tpu_custom_call.1} parent=1 // pred_fallthru
      _
    // Predicated region
    $region18: #{tpu_custom_call.1} parent=1 // pred_check
      _
    $region19: #{tpu_custom_call.1} parent=1 // pred_check_branch
      %32 = sbr.rel (0) target = $region21
    $region20: #{tpu_custom_call.1} parent=1 // pred_region
      _
    $region21: #{tpu_custom_call.1} parent=1 // pred_fallthru
      _
    // Predicated region
    $region22: #{tpu_custom_call.1} parent=1 // pred_check
      _
    $region23: #{tpu_custom_call.1} parent=1 // pred_check_branch
      %34 = sbr.rel (0) target = $region25
    $region24: #{tpu_custom_call.1} parent=1 // pred_region
      _
    $region25: #{tpu_custom_call.1} parent=1 // pred_fallthru
      _
    // Predicated region
    $region26: #{tpu_custom_call.1} parent=1 // pred_check
      _
    $region27: #{tpu_custom_call.1} parent=1 // pred_check_branch
      %36 = sbr.rel (0) target = $region29
    $region28: #{tpu_custom_call.1} parent=1 // pred_region
      _
    $region29: #{tpu_custom_call.1} parent=1 // pred_fallthru
      _
    // Predicated region
    $region30: #{tpu_custom_call.1} parent=1 // pred_check
      _
    $region31: #{tpu_custom_call.1} parent=1 // pred_check_branch
      %38 = sbr.rel (0) target = $region33
    $region32: #{tpu_custom_call.1} parent=1 // pred_region
      %s40 = ssub.s32 1024, 1024
      %41 = vsyncadd [#allocation4], %s40
      %s42 = sshll.u32 [#allocation3], 4
      %s43 = int_to_ptr.vmem [resolvable:$true] %s42
      %48 = dma.hbm_to_vmem [thread:$0]  %s7, 1024, %s43, [#allocation4], 64, 64, 4
    $region33: #{tpu_custom_call.1} parent=1 // pred_fallthru
      _
    // Predicated region
    $region34: #{tpu_custom_call.1} parent=1 // pred_check
      _
    $region35: #{tpu_custom_call.1} parent=1 // pred_check_branch
      %50 = sbr.rel (0) target = $region37
    $region36: #{tpu_custom_call.1} parent=1 // pred_region
      _
    $region37: #{tpu_custom_call.1} parent=1 // pred_fallthru
      _
    // Predicated region
    $region38: #{tpu_custom_call.1} parent=1 // pred_check
      _
    $region39: #{tpu_custom_call.1} parent=1 // pred_check_branch
      %52 = sbr.rel (0) target = $region41
    $region40: #{tpu_custom_call.1} parent=1 // pred_region
      %s54 = ssub.s32 1024, 1024
      %55 = vsyncadd [#allocation7], %s54
      %s56 = sshll.u32 [#allocation6], 4
      %s57 = int_to_ptr.vmem [resolvable:$true] %s56
      %62 = dma.hbm_to_vmem [thread:$0]  %s9, 1024, %s57, [#allocation7], 64, 64, 4
    $region41: #{tpu_custom_call.1} parent=1 // pred_fallthru
      _
    // Predicated region
    $region42: #{tpu_custom_call.1} parent=1 // pred_check
      _
    $region43: #{tpu_custom_call.1} parent=1 // pred_check_branch
      %64 = sbr.rel (0) target = $region45
    $region44: #{tpu_custom_call.1} parent=1 // pred_region
      _
    $region45: #{tpu_custom_call.1} parent=1 // pred_fallthru
      _
    // Predicated region
    $region46: #{tpu_custom_call.1} parent=1 // pred_check
      _
    $region47: #{tpu_custom_call.1} parent=1 // pred_check_branch
      %66 = sbr.rel (0) target = $region49
    $region48: #{tpu_custom_call.1} parent=1 // pred_region
      _
    $region49: #{tpu_custom_call.1} parent=1 // pred_fallthru
      _
    // Predicated region
    $region50: #{tpu_custom_call.1} parent=1 // pred_check
      _
    $region51: #{tpu_custom_call.1} parent=1 // pred_check_branch
      %68 = sbr.rel (0) target = $region53
    $region52: #{tpu_custom_call.1} parent=1 // pred_region
      _
    $region53: #{tpu_custom_call.1} parent=1 // pred_fallthru
      _
    // Predicated region
    $region54: #{tpu_custom_call.1} parent=1 // pred_check
      _
    $region55: #{tpu_custom_call.1} parent=1 // pred_check_branch
      %70 = sbr.rel (0) target = $region57
    $region56: #{tpu_custom_call.1} parent=1 // pred_region
      %71 = dma.done [#allocation4], 1024
    $region57: #{tpu_custom_call.1} parent=1 // pred_fallthru
      _
    // Predicated region
    $region58: #{tpu_custom_call.1} parent=1 // pred_check
      _
    $region59: #{tpu_custom_call.1} parent=1 // pred_check_branch
      %73 = sbr.rel (0) target = $region61
    $region60: #{tpu_custom_call.1} parent=1 // pred_region
      %74 = dma.done [#allocation7], 1024
    $region61: #{tpu_custom_call.1} parent=1 // pred_fallthru
      _
    %v76 = vld [vmem:[%s0] sm:$0xff]
    %v77 = vld [vmem:[%s0 + $0x8] sm:$0xff]
    %v78 = vld [vmem:[%s0 + $0x10] sm:$0xff]
    %v79 = vld [vmem:[%s0 + $0x18] sm:$0xff]
    %v80 = vld [vmem:[%s0 + $0x20] sm:$0xff]
    %v81 = vld [vmem:[%s0 + $0x28] sm:$0xff]
    %v82 = vld [vmem:[%s0 + $0x30] sm:$0xff]
    %v83 = vld [vmem:[%s0 + $0x38] sm:$0xff]
    %v84 = vld [vmem:[%s0 + $0x40] sm:$0xff]
    %v85 = vld [vmem:[%s0 + $0x48] sm:$0xff]
    %v86 = vld [vmem:[%s0 + $0x50] sm:$0xff]
    %v87 = vld [vmem:[%s0 + $0x58] sm:$0xff]
    %v88 = vld [vmem:[%s0 + $0x60] sm:$0xff]
    %v89 = vld [vmem:[%s0 + $0x68] sm:$0xff]
    %v90 = vld [vmem:[%s0 + $0x70] sm:$0xff]
    %v91 = vld [vmem:[%s0 + $0x78] sm:$0xff]
    %v92 = vpack.c.bf16 %v77, %v76
    %v93 = vpack.c.bf16 %v79, %v78
    %v94 = vpack.c.bf16 %v81, %v80
    %v95 = vpack.c.bf16 %v83, %v82
    %v96 = vpack.c.bf16 %v85, %v84
    %v97 = vpack.c.bf16 %v87, %v86
    %v98 = vpack.c.bf16 %v89, %v88
    %v99 = vpack.c.bf16 %v91, %v90
    %v100 = vld [vmem:[%s1] sm:$0xff]
    %v101 = vld [vmem:[%s1 + $0x8] sm:$0xff]
    %v102 = vld [vmem:[%s1 + $0x10] sm:$0xff]
    %v103 = vld [vmem:[%s1 + $0x18] sm:$0xff]
    %v104 = vld [vmem:[%s2] sm:$0x3]
    %v106 = vlaneseq
    %v107 = vshrl.u32 %v106, 7
    %v108 = vsub.s32 0, %v107
    %v109 = vrot.slane %v104, %v108
    %v110 = vlaneseq
    %v111 = vshrl.u32 %v110, 7
    %v112 = vsub.s32 1, %v111
    %v113 = vrot.slane %v104, %v112
    %v120 = vunpack.c.l.b16 %v100
    %v121 = vunpack.c.h.b16 %v100
    %v122 = vunpack.c.l.b16 %v101
    %v123 = vunpack.c.h.b16 %v101
    %v124 = vunpack.c.l.b16 %v102
    %v125 = vunpack.c.h.b16 %v102
    %v126 = vunpack.c.l.b16 %v103
    %v127 = vunpack.c.h.b16 %v103
    %v128 = vpack.c.b16 %v122, %v120
    %v129 = vpack.c.b16 %v123, %v121
    %v130 = vpack.c.b16 %v126, %v124
    %v131 = vpack.c.b16 %v127, %v125
    %vm136 = vcmask 261120
    %v138 = vsel %vm136, %v92, 0
    %v141 = vsel %vm136, %v93, 0
    %v144 = vsel %vm136, %v94, 0
    %v147 = vsel %vm136, %v95, 0
    %v150 = vsel %vm136, %v96, 0
    %v153 = vsel %vm136, %v97, 0
    %v156 = vsel %vm136, %v98, 0
    %v159 = vsel %vm136, %v99, 0
    %161 = vmatprep.subr.bf16.mxu0 0
    %162 = vmatpush1.bf16.msra.mxu0 0
    %163 = vmatprep.subr.bf16.mxu0 0
    %164 = vmatpush1.bf16.msra.mxu0 0
    %165 = vmatprep.subr.bf16.mxu0 0
    %166 = vmatpush1.bf16.msra.mxu0 0
    %167 = vmatprep.subr.bf16.mxu0 0
    %168 = vmatpush1.bf16.msra.mxu0 0
    %169 = vmatprep.subr.bf16.mxu0 0
    %170 = vmatpush1.bf16.msra.mxu0 0
    %171 = vmatprep.subr.bf16.mxu0 0
    %172 = vmatpush1.bf16.msra.mxu0 0
    %173 = vmatprep.subr.bf16.mxu0 %v131
    %174 = vmatpush1.bf16.msra.mxu0 %v130
    %175 = vmatprep.subr.bf16.mxu0 %v129
    %176 = vmatpush1.bf16.msra.mxu0 %v128
    %177 = vmatprep.subr.bf16.mxu0 0
    %178 = vmatpush2.bf16.msra.mxu0 0
    %179 = vmatprep.subr.bf16.mxu0 0
    %180 = vmatpush2.bf16.msra.mxu0 0
    %181 = vmatprep.subr.bf16.mxu0 0
    %182 = vmatpush2.bf16.msra.mxu0 0
    %183 = vmatprep.subr.bf16.mxu0 0
    %184 = vmatpush2.bf16.msra.mxu0 0
    %185 = vmatprep.subr.bf16.mxu0 0
    %186 = vmatpush2.bf16.msra.mxu0 0
    %187 = vmatprep.subr.bf16.mxu0 0
    %188 = vmatpush2.bf16.msra.mxu0 0
    %189 = vmatprep.subr.bf16.mxu0 0
    %190 = vmatpush2.bf16.msra.mxu0 0
    %191 = vmatprep.subr.bf16.mxu0 0
    %192 = vmatpush2.bf16.msra.mxu0 0
    %193 = vmatprep.mubr.bf16.mxu0 0
    %194 = vmatmul.mubr.bf16.gmra.mxu0 %v138
    %v195 = vpop.f32.mrf.mxu0
    %v196 = vadd.f32 %v109, %v195
    %v197 = vpop.f32.mrf.mxu0
    %v198 = vadd.f32 %v113, %v197
    %v199 = vpop.f32.mrf.mxu0
    %v200 = vadd.f32 %v109, %v199
    %v201 = vpop.f32.mrf.mxu0
    %v202 = vadd.f32 %v113, %v201
    %203 = vmatprep.mubr.bf16.mxu0 0
    %204 = vmatmul.mubr.bf16.gmra.mxu0 %v141
    %v205 = vpop.f32.mrf.mxu0
    %v206 = vadd.f32 %v109, %v205
    %v207 = vpop.f32.mrf.mxu0
    %v208 = vadd.f32 %v113, %v207
    %v209 = vpop.f32.mrf.mxu0
    %v210 = vadd.f32 %v109, %v209
    %v211 = vpop.f32.mrf.mxu0
    %v212 = vadd.f32 %v113, %v211
    %213 = vmatprep.mubr.bf16.mxu0 0
    %214 = vmatmul.mubr.bf16.gmra.mxu0 %v144
    %v215 = vpop.f32.mrf.mxu0
    %v216 = vadd.f32 %v109, %v215
    %v217 = vpop.f32.mrf.mxu0
    %v218 = vadd.f32 %v113, %v217
    %v219 = vpop.f32.mrf.mxu0
    %v220 = vadd.f32 %v109, %v219
    %v221 = vpop.f32.mrf.mxu0
    %v222 = vadd.f32 %v113, %v221
    %223 = vmatprep.mubr.bf16.mxu0 0
    %224 = vmatmul.mubr.bf16.gmra.mxu0 %v147
    %v225 = vpop.f32.mrf.mxu0
    %v226 = vadd.f32 %v109, %v225
    %v227 = vpop.f32.mrf.mxu0
    %v228 = vadd.f32 %v113, %v227
    %v229 = vpop.f32.mrf.mxu0
    %v230 = vadd.f32 %v109, %v229
    %v231 = vpop.f32.mrf.mxu0
    %v232 = vadd.f32 %v113, %v231
    %233 = vmatprep.mubr.bf16.mxu0 0
    %234 = vmatmul.mubr.bf16.gmra.mxu0 %v150
    %v235 = vpop.f32.mrf.mxu0
    %v236 = vadd.f32 %v109, %v235
    %v237 = vpop.f32.mrf.mxu0
    %v238 = vadd.f32 %v113, %v237
    %v239 = vpop.f32.mrf.mxu0
    %v240 = vadd.f32 %v109, %v239
    %v241 = vpop.f32.mrf.mxu0
    %v242 = vadd.f32 %v113, %v241
    %243 = vmatprep.mubr.bf16.mxu0 0
    %244 = vmatmul.mubr.bf16.gmra.mxu0 %v153
    %v245 = vpop.f32.mrf.mxu0
    %v246 = vadd.f32 %v109, %v245
    %v247 = vpop.f32.mrf.mxu0
    %v248 = vadd.f32 %v113, %v247
    %v249 = vpop.f32.mrf.mxu0
    %v250 = vadd.f32 %v109, %v249
    %v251 = vpop.f32.mrf.mxu0
    %v252 = vadd.f32 %v113, %v251
    %253 = vmatprep.mubr.bf16.mxu0 0
    %254 = vmatmul.mubr.bf16.gmra.mxu0 %v156
    %v255 = vpop.f32.mrf.mxu0
    %v256 = vadd.f32 %v109, %v255
    %v257 = vpop.f32.mrf.mxu0
    %v258 = vadd.f32 %v113, %v257
    %v259 = vpop.f32.mrf.mxu0
    %v260 = vadd.f32 %v109, %v259
    %v261 = vpop.f32.mrf.mxu0
    %v262 = vadd.f32 %v113, %v261
    %263 = vmatprep.mubr.bf16.mxu0 0
    %264 = vmatmul.mubr.bf16.gmra.mxu0 %v159
    %v265 = vpop.f32.mrf.mxu0
    %v266 = vadd.f32 %v109, %v265
    %v267 = vpop.f32.mrf.mxu0
    %v268 = vadd.f32 %v113, %v267
    %v269 = vpop.f32.mrf.mxu0
    %v270 = vadd.f32 %v109, %v269
    %v271 = vpop.f32.mrf.mxu0
    %v272 = vadd.f32 %v113, %v271
    %273 = vdwg.mxu0
    %v274 = vmax.f32 %v196, 0.0
    %v275 = vmax.f32 %v198, 0.0
    %v276 = vmax.f32 %v200, 0.0
    %v277 = vmax.f32 %v202, 0.0
    %v278 = vmax.f32 %v206, 0.0
    %v279 = vmax.f32 %v208, 0.0
    %v280 = vmax.f32 %v210, 0.0
    %v281 = vmax.f32 %v212, 0.0
    %v282 = vmax.f32 %v216, 0.0
    %v283 = vmax.f32 %v218, 0.0
    %v284 = vmax.f32 %v220, 0.0
    %v285 = vmax.f32 %v222, 0.0
    %v286 = vmax.f32 %v226, 0.0
    %v287 = vmax.f32 %v228, 0.0
    %v288 = vmax.f32 %v230, 0.0
    %v289 = vmax.f32 %v232, 0.0
    %v290 = vmax.f32 %v236, 0.0
    %v291 = vmax.f32 %v238, 0.0
    %v292 = vmax.f32 %v240, 0.0
    %v293 = vmax.f32 %v242, 0.0
    %v294 = vmax.f32 %v246, 0.0
    %v295 = vmax.f32 %v248, 0.0
    %v296 = vmax.f32 %v250, 0.0
    %v297 = vmax.f32 %v252, 0.0
    %v298 = vmax.f32 %v256, 0.0
    %v299 = vmax.f32 %v258, 0.0
    %v300 = vmax.f32 %v260, 0.0
    %v301 = vmax.f32 %v262, 0.0
    %v302 = vmax.f32 %v266, 0.0
    %v303 = vmax.f32 %v268, 0.0
    %v304 = vmax.f32 %v270, 0.0
    %v305 = vmax.f32 %v272, 0.0
    %v306 = vpack.c.bf16 %v276, %v274
    %v307 = vpack.c.bf16 %v277, %v275
    %v308 = vpack.c.bf16 %v280, %v278
    %v309 = vpack.c.bf16 %v281, %v279
    %v310 = vpack.c.bf16 %v284, %v282
    %v311 = vpack.c.bf16 %v285, %v283
    %v312 = vpack.c.bf16 %v288, %v286
    %v313 = vpack.c.bf16 %v289, %v287
    %v314 = vpack.c.bf16 %v292, %v290
    %v315 = vpack.c.bf16 %v293, %v291
    %v316 = vpack.c.bf16 %v296, %v294
    %v317 = vpack.c.bf16 %v297, %v295
    %v318 = vpack.c.bf16 %v300, %v298
    %v319 = vpack.c.bf16 %v301, %v299
    %v320 = vpack.c.bf16 %v304, %v302
    %v321 = vpack.c.bf16 %v305, %v303
    %v322 = vld [vmem:[%s3] sm:$0xf]
    %v323 = vld [vmem:[%s3 + $0x4] sm:$0xf]
    %v324 = vld [vmem:[%s3 + $0x8] sm:$0xf]
    %v325 = vld [vmem:[%s3 + $0xc] sm:$0xf]
    %v326 = vld [vmem:[%s3 + $0x10] sm:$0xf]
    %v327 = vld [vmem:[%s3 + $0x14] sm:$0xf]
    %v328 = vld [vmem:[%s3 + $0x18] sm:$0xf]
    %v329 = vld [vmem:[%s3 + $0x1c] sm:$0xf]
    %v330 = vld [vmem:[%s3 + $0x20] sm:$0xf]
    %v331 = vld [vmem:[%s3 + $0x24] sm:$0xf]
    %v332 = vld [vmem:[%s3 + $0x28] sm:$0xf]
    %v333 = vld [vmem:[%s3 + $0x2c] sm:$0xf]
    %v334 = vld [vmem:[%s3 + $0x30] sm:$0xf]
    %v335 = vld [vmem:[%s3 + $0x34] sm:$0xf]
    %v336 = vld [vmem:[%s3 + $0x38] sm:$0xf]
    %v337 = vld [vmem:[%s3 + $0x3c] sm:$0xf]
    %v338 = vld [vmem:[%s3 + $0x40] sm:$0xf]
    %v339 = vld [vmem:[%s3 + $0x44] sm:$0xf]
    %v340 = vld [vmem:[%s3 + $0x48] sm:$0xf]
    %v341 = vld [vmem:[%s3 + $0x4c] sm:$0xf]
    %v342 = vld [vmem:[%s3 + $0x50] sm:$0xf]
    %v343 = vld [vmem:[%s3 + $0x54] sm:$0xf]
    %v344 = vld [vmem:[%s3 + $0x58] sm:$0xf]
    %v345 = vld [vmem:[%s3 + $0x5c] sm:$0xf]
    %v346 = vld [vmem:[%s3 + $0x60] sm:$0xf]
    %v347 = vld [vmem:[%s3 + $0x64] sm:$0xf]
    %v348 = vld [vmem:[%s3 + $0x68] sm:$0xf]
    %v349 = vld [vmem:[%s3 + $0x6c] sm:$0xf]
    %v350 = vld [vmem:[%s3 + $0x70] sm:$0xf]
    %v351 = vld [vmem:[%s3 + $0x74] sm:$0xf]
    %v352 = vld [vmem:[%s3 + $0x78] sm:$0xf]
    %v353 = vld [vmem:[%s3 + $0x7c] sm:$0xf]
    %v354 = vld [vmem:[%s4] sm:$0x1]
    %v356 = vlaneseq
    %v357 = vshrl.u32 %v356, 7
    %v358 = vsub.s32 0, %v357
    %v359 = vrot.slane %v354, %v358
    %v393 = vunpack.c.l.b16 %v322
    %v394 = vunpack.c.l.b16 %v323
    %v395 = vunpack.c.l.b16 %v324
    %v396 = vunpack.c.l.b16 %v325
    %v397 = vunpack.c.l.b16 %v326
    %v398 = vunpack.c.l.b16 %v327
    %v399 = vunpack.c.l.b16 %v328
    %v400 = vunpack.c.l.b16 %v329
    %v401 = vunpack.c.l.b16 %v330
    %v402 = vunpack.c.l.b16 %v331
    %v403 = vunpack.c.l.b16 %v332
    %v404 = vunpack.c.l.b16 %v333
    %v405 = vunpack.c.l.b16 %v334
    %v406 = vunpack.c.l.b16 %v335
    %v407 = vunpack.c.l.b16 %v336
    %v408 = vunpack.c.l.b16 %v337
    %v409 = vunpack.c.l.b16 %v338
    %v410 = vunpack.c.l.b16 %v339
    %v411 = vunpack.c.l.b16 %v340
    %v412 = vunpack.c.l.b16 %v341
    %v413 = vunpack.c.l.b16 %v342
    %v414 = vunpack.c.l.b16 %v343
    %v415 = vunpack.c.l.b16 %v344
    %v416 = vunpack.c.l.b16 %v345
    %v417 = vunpack.c.l.b16 %v346
    %v418 = vunpack.c.l.b16 %v347
    %v419 = vunpack.c.l.b16 %v348
    %v420 = vunpack.c.l.b16 %v349
    %v421 = vunpack.c.l.b16 %v350
    %v422 = vunpack.c.l.b16 %v351
    %v423 = vunpack.c.l.b16 %v352
    %v424 = vunpack.c.l.b16 %v353
    %v425 = vpack.c.b16 %v394, %v393
    %v426 = vpack.c.b16 %v396, %v395
    %v427 = vpack.c.b16 %v398, %v397
    %v428 = vpack.c.b16 %v400, %v399
    %v429 = vpack.c.b16 %v402, %v401
    %v430 = vpack.c.b16 %v404, %v403
    %v431 = vpack.c.b16 %v406, %v405
    %v432 = vpack.c.b16 %v408, %v407
    %v433 = vpack.c.b16 %v410, %v409
    %v434 = vpack.c.b16 %v412, %v411
    %v435 = vpack.c.b16 %v414, %v413
    %v436 = vpack.c.b16 %v416, %v415
    %v437 = vpack.c.b16 %v418, %v417
    %v438 = vpack.c.b16 %v420, %v419
    %v439 = vpack.c.b16 %v422, %v421
    %v440 = vpack.c.b16 %v424, %v423
    %457 = vmatprep.subr.bf16.mxu0 0
    %458 = vmatpush1.bf16.msra.mxu0 %v432
    %459 = vmatprep.subr.bf16.mxu0 0
    %460 = vmatpush1.bf16.msra.mxu0 %v431
    %461 = vmatprep.subr.bf16.mxu0 0
    %462 = vmatpush1.bf16.msra.mxu0 %v430
    %463 = vmatprep.subr.bf16.mxu0 0
    %464 = vmatpush1.bf16.msra.mxu0 %v429
    %465 = vmatprep.subr.bf16.mxu0 0
    %466 = vmatpush1.bf16.msra.mxu0 %v428
    %467 = vmatprep.subr.bf16.mxu0 0
    %468 = vmatpush1.bf16.msra.mxu0 %v427
    %469 = vmatprep.subr.bf16.mxu0 0
    %470 = vmatpush1.bf16.msra.mxu0 %v426
    %471 = vmatprep.subr.bf16.mxu0 0
    %472 = vmatpush1.bf16.msra.mxu0 %v425
    %473 = vmatprep.subr.bf16.mxu0 0
    %474 = vmatpush2.bf16.msra.mxu0 %v440
    %475 = vmatprep.subr.bf16.mxu0 0
    %476 = vmatpush2.bf16.msra.mxu0 %v439
    %477 = vmatprep.subr.bf16.mxu0 0
    %478 = vmatpush2.bf16.msra.mxu0 %v438
    %479 = vmatprep.subr.bf16.mxu0 0
    %480 = vmatpush2.bf16.msra.mxu0 %v437
    %481 = vmatprep.subr.bf16.mxu0 0
    %482 = vmatpush2.bf16.msra.mxu0 %v436
    %483 = vmatprep.subr.bf16.mxu0 0
    %484 = vmatpush2.bf16.msra.mxu0 %v435
    %485 = vmatprep.subr.bf16.mxu0 0
    %486 = vmatpush2.bf16.msra.mxu0 %v434
    %487 = vmatprep.subr.bf16.mxu0 0
    %488 = vmatpush2.bf16.msra.mxu0 %v433
    %489 = vmatprep.mubr.bf16.mxu0 %v307
    %490 = vmatmul.mubr.bf16.gmra.mxu0 %v306
    %v491 = vpop.f32.mrf.mxu0
    %v492 = vadd.f32 %v359, %v491
    %v493 = vpop.f32.mrf.mxu0
    %v494 = vpop.f32.mrf.mxu0
    %v495 = vadd.f32 %v359, %v494
    %v496 = vpop.f32.mrf.mxu0
    %497 = vmatprep.mubr.bf16.mxu0 %v309
    %498 = vmatmul.mubr.bf16.gmra.mxu0 %v308
    %v499 = vpop.f32.mrf.mxu0
    %v500 = vadd.f32 %v359, %v499
    %v501 = vpop.f32.mrf.mxu0
    %v502 = vpop.f32.mrf.mxu0
    %v503 = vadd.f32 %v359, %v502
    %v504 = vpop.f32.mrf.mxu0
    %505 = vmatprep.mubr.bf16.mxu0 %v311
    %506 = vmatmul.mubr.bf16.gmra.mxu0 %v310
    %v507 = vpop.f32.mrf.mxu0
    %v508 = vadd.f32 %v359, %v507
    %v509 = vpop.f32.mrf.mxu0
    %v510 = vpop.f32.mrf.mxu0
    %v511 = vadd.f32 %v359, %v510
    %v512 = vpop.f32.mrf.mxu0
    %513 = vmatprep.mubr.bf16.mxu0 %v313
    %514 = vmatmul.mubr.bf16.gmra.mxu0 %v312
    %v515 = vpop.f32.mrf.mxu0
    %v516 = vadd.f32 %v359, %v515
    %v517 = vpop.f32.mrf.mxu0
    %v518 = vpop.f32.mrf.mxu0
    %v519 = vadd.f32 %v359, %v518
    %v520 = vpop.f32.mrf.mxu0
    %521 = vmatprep.mubr.bf16.mxu0 %v315
    %522 = vmatmul.mubr.bf16.gmra.mxu0 %v314
    %v523 = vpop.f32.mrf.mxu0
    %v524 = vadd.f32 %v359, %v523
    %v525 = vpop.f32.mrf.mxu0
    %v526 = vpop.f32.mrf.mxu0
    %v527 = vadd.f32 %v359, %v526
    %v528 = vpop.f32.mrf.mxu0
    %529 = vmatprep.mubr.bf16.mxu0 %v317
    %530 = vmatmul.mubr.bf16.gmra.mxu0 %v316
    %v531 = vpop.f32.mrf.mxu0
    %v532 = vadd.f32 %v359, %v531
    %v533 = vpop.f32.mrf.mxu0
    %v534 = vpop.f32.mrf.mxu0
    %v535 = vadd.f32 %v359, %v534
    %v536 = vpop.f32.mrf.mxu0
    %537 = vmatprep.mubr.bf16.mxu0 %v319
    %538 = vmatmul.mubr.bf16.gmra.mxu0 %v318
    %v539 = vpop.f32.mrf.mxu0
    %v540 = vadd.f32 %v359, %v539
    %v541 = vpop.f32.mrf.mxu0
    %v542 = vpop.f32.mrf.mxu0
    %v543 = vadd.f32 %v359, %v542
    %v544 = vpop.f32.mrf.mxu0
    %545 = vmatprep.mubr.bf16.mxu0 %v321
    %546 = vmatmul.mubr.bf16.gmra.mxu0 %v320
    %v547 = vpop.f32.mrf.mxu0
    %v548 = vadd.f32 %v359, %v547
    %v549 = vpop.f32.mrf.mxu0
    %v550 = vpop.f32.mrf.mxu0
    %v551 = vadd.f32 %v359, %v550
    %v552 = vpop.f32.mrf.mxu0
    %553 = vdwg.mxu0
    %v554 = vmax.f32 %v492, 0.0
    %v555 = vmax.f32 %v495, 0.0
    %v556 = vmax.f32 %v500, 0.0
    %v557 = vmax.f32 %v503, 0.0
    %v558 = vmax.f32 %v508, 0.0
    %v559 = vmax.f32 %v511, 0.0
    %v560 = vmax.f32 %v516, 0.0
    %v561 = vmax.f32 %v519, 0.0
    %v562 = vmax.f32 %v524, 0.0
    %v563 = vmax.f32 %v527, 0.0
    %v564 = vmax.f32 %v532, 0.0
    %v565 = vmax.f32 %v535, 0.0
    %v566 = vmax.f32 %v540, 0.0
    %v567 = vmax.f32 %v543, 0.0
    %v568 = vmax.f32 %v548, 0.0
    %v569 = vmax.f32 %v551, 0.0
    %v570 = vpack.c.bf16 %v555, %v554
    %v571 = vpack.c.bf16 %v557, %v556
    %v572 = vpack.c.bf16 %v559, %v558
    %v573 = vpack.c.bf16 %v561, %v560
    %v574 = vpack.c.bf16 %v563, %v562
    %v575 = vpack.c.bf16 %v565, %v564
    %v576 = vpack.c.bf16 %v567, %v566
    %v577 = vpack.c.bf16 %v569, %v568
    %v578 = vld [vmem:[%s5] sm:$0xf]
    %v579 = vld [vmem:[%s5 + $0x4] sm:$0xf]
    %v580 = vld [vmem:[%s5 + $0x8] sm:$0xf]
    %v581 = vld [vmem:[%s5 + $0xc] sm:$0xf]
    %v582 = vld [vmem:[%s5 + $0x10] sm:$0xf]
    %v583 = vld [vmem:[%s5 + $0x14] sm:$0xf]
    %v584 = vld [vmem:[%s5 + $0x18] sm:$0xf]
    %v585 = vld [vmem:[%s5 + $0x1c] sm:$0xf]
    %v586 = vld [vmem:[%s5 + $0x20] sm:$0xf]
    %v587 = vld [vmem:[%s5 + $0x24] sm:$0xf]
    %v588 = vld [vmem:[%s5 + $0x28] sm:$0xf]
    %v589 = vld [vmem:[%s5 + $0x2c] sm:$0xf]
    %v590 = vld [vmem:[%s5 + $0x30] sm:$0xf]
    %v591 = vld [vmem:[%s5 + $0x34] sm:$0xf]
    %v592 = vld [vmem:[%s5 + $0x38] sm:$0xf]
    %v593 = vld [vmem:[%s5 + $0x3c] sm:$0xf]
    %v594 = vld [vmem:[%s6] sm:$0x1]
    %v596 = vlaneseq
    %v597 = vshrl.u32 %v596, 7
    %v598 = vsub.s32 0, %v597
    %v599 = vrot.slane %v594, %v598
    %v617 = vunpack.c.l.b16 %v578
    %v618 = vunpack.c.l.b16 %v579
    %v619 = vunpack.c.l.b16 %v580
    %v620 = vunpack.c.l.b16 %v581
    %v621 = vunpack.c.l.b16 %v582
    %v622 = vunpack.c.l.b16 %v583
    %v623 = vunpack.c.l.b16 %v584
    %v624 = vunpack.c.l.b16 %v585
    %v625 = vunpack.c.l.b16 %v586
    %v626 = vunpack.c.l.b16 %v587
    %v627 = vunpack.c.l.b16 %v588
    %v628 = vunpack.c.l.b16 %v589
    %v629 = vunpack.c.l.b16 %v590
    %v630 = vunpack.c.l.b16 %v591
    %v631 = vunpack.c.l.b16 %v592
    %v632 = vunpack.c.l.b16 %v593
    %v633 = vpack.c.b16 %v618, %v617
    %v634 = vpack.c.b16 %v620, %v619
    %v635 = vpack.c.b16 %v622, %v621
    %v636 = vpack.c.b16 %v624, %v623
    %v637 = vpack.c.b16 %v626, %v625
    %v638 = vpack.c.b16 %v628, %v627
    %v639 = vpack.c.b16 %v630, %v629
    %v640 = vpack.c.b16 %v632, %v631
    %649 = vmatprep.subr.bf16.mxu0 0
    %650 = vmatpush1.bf16.msra.mxu0 %v640
    %651 = vmatprep.subr.bf16.mxu0 0
    %652 = vmatpush1.bf16.msra.mxu0 %v639
    %653 = vmatprep.subr.bf16.mxu0 0
    %654 = vmatpush1.bf16.msra.mxu0 %v638
    %655 = vmatprep.subr.bf16.mxu0 0
    %656 = vmatpush1.bf16.msra.mxu0 %v637
    %657 = vmatprep.subr.bf16.mxu0 0
    %658 = vmatpush1.bf16.msra.mxu0 %v636
    %659 = vmatprep.subr.bf16.mxu0 0
    %660 = vmatpush1.bf16.msra.mxu0 %v635
    %661 = vmatprep.subr.bf16.mxu0 0
    %662 = vmatpush1.bf16.msra.mxu0 %v634
    %663 = vmatprep.subr.bf16.mxu0 0
    %664 = vmatpush1.bf16.msra.mxu0 %v633
    %665 = vmatprep.subr.bf16.mxu0 0
    %666 = vmatpush2.bf16.msra.mxu0 0
    %667 = vmatprep.subr.bf16.mxu0 0
    %668 = vmatpush2.bf16.msra.mxu0 0
    %669 = vmatprep.subr.bf16.mxu0 0
    %670 = vmatpush2.bf16.msra.mxu0 0
    %671 = vmatprep.subr.bf16.mxu0 0
    %672 = vmatpush2.bf16.msra.mxu0 0
    %673 = vmatprep.subr.bf16.mxu0 0
    %674 = vmatpush2.bf16.msra.mxu0 0
    %675 = vmatprep.subr.bf16.mxu0 0
    %676 = vmatpush2.bf16.msra.mxu0 0
    %677 = vmatprep.subr.bf16.mxu0 0
    %678 = vmatpush2.bf16.msra.mxu0 0
    %679 = vmatprep.subr.bf16.mxu0 0
    %680 = vmatpush2.bf16.msra.mxu0 0
    %681 = vmatprep.mubr.bf16.mxu0 0
    %682 = vmatmul.mubr.bf16.gmra.mxu0 %v570
    %v683 = vpop.f32.mrf.mxu0
    %v684 = vadd.f32 %v599, %v683
    %v685 = vpop.f32.mrf.mxu0
    %v686 = vpop.f32.mrf.mxu0
    %v687 = vadd.f32 %v599, %v686
    %v688 = vpop.f32.mrf.mxu0
    %689 = vmatprep.mubr.bf16.mxu0 0
    %690 = vmatmul.mubr.bf16.gmra.mxu0 %v571
    %v691 = vpop.f32.mrf.mxu0
    %v692 = vadd.f32 %v599, %v691
    %v693 = vpop.f32.mrf.mxu0
    %v694 = vpop.f32.mrf.mxu0
    %v695 = vadd.f32 %v599, %v694
    %v696 = vpop.f32.mrf.mxu0
    %697 = vmatprep.mubr.bf16.mxu0 0
    %698 = vmatmul.mubr.bf16.gmra.mxu0 %v572
    %v699 = vpop.f32.mrf.mxu0
    %v700 = vadd.f32 %v599, %v699
    %v701 = vpop.f32.mrf.mxu0
    %v702 = vpop.f32.mrf.mxu0
    %v703 = vadd.f32 %v599, %v702
    %v704 = vpop.f32.mrf.mxu0
    %705 = vmatprep.mubr.bf16.mxu0 0
    %706 = vmatmul.mubr.bf16.gmra.mxu0 %v573
    %v707 = vpop.f32.mrf.mxu0
    %v708 = vadd.f32 %v599, %v707
    %v709 = vpop.f32.mrf.mxu0
    %v710 = vpop.f32.mrf.mxu0
    %v711 = vadd.f32 %v599, %v710
    %v712 = vpop.f32.mrf.mxu0
    %713 = vmatprep.mubr.bf16.mxu0 0
    %714 = vmatmul.mubr.bf16.gmra.mxu0 %v574
    %v715 = vpop.f32.mrf.mxu0
    %v716 = vadd.f32 %v599, %v715
    %v717 = vpop.f32.mrf.mxu0
    %v718 = vpop.f32.mrf.mxu0
    %v719 = vadd.f32 %v599, %v718
    %v720 = vpop.f32.mrf.mxu0
    %721 = vmatprep.mubr.bf16.mxu0 0
    %722 = vmatmul.mubr.bf16.gmra.mxu0 %v575
    %v723 = vpop.f32.mrf.mxu0
    %v724 = vadd.f32 %v599, %v723
    %v725 = vpop.f32.mrf.mxu0
    %v726 = vpop.f32.mrf.mxu0
    %v727 = vadd.f32 %v599, %v726
    %v728 = vpop.f32.mrf.mxu0
    %729 = vmatprep.mubr.bf16.mxu0 0
    %730 = vmatmul.mubr.bf16.gmra.mxu0 %v576
    %v731 = vpop.f32.mrf.mxu0
    %v732 = vadd.f32 %v599, %v731
    %v733 = vpop.f32.mrf.mxu0
    %v734 = vpop.f32.mrf.mxu0
    %v735 = vadd.f32 %v599, %v734
    %v736 = vpop.f32.mrf.mxu0
    %737 = vmatprep.mubr.bf16.mxu0 0
    %738 = vmatmul.mubr.bf16.gmra.mxu0 %v577
    %v739 = vpop.f32.mrf.mxu0
    %v740 = vadd.f32 %v599, %v739
    %v741 = vpop.f32.mrf.mxu0
    %v742 = vpop.f32.mrf.mxu0
    %v743 = vadd.f32 %v599, %v742
    %v744 = vpop.f32.mrf.mxu0
    %745 = vdwg.mxu0
    %v746 = vmax.f32 %v684, 0.0
    %v747 = vmax.f32 %v687, 0.0
    %v748 = vmax.f32 %v692, 0.0
    %v749 = vmax.f32 %v695, 0.0
    %v750 = vmax.f32 %v700, 0.0
    %v751 = vmax.f32 %v703, 0.0
    %v752 = vmax.f32 %v708, 0.0
    %v753 = vmax.f32 %v711, 0.0
    %v754 = vmax.f32 %v716, 0.0
    %v755 = vmax.f32 %v719, 0.0
    %v756 = vmax.f32 %v724, 0.0
    %v757 = vmax.f32 %v727, 0.0
    %v758 = vmax.f32 %v732, 0.0
    %v759 = vmax.f32 %v735, 0.0
    %v760 = vmax.f32 %v740, 0.0
    %v761 = vmax.f32 %v743, 0.0
    %v762 = vpack.c.bf16 %v747, %v746
    %v763 = vpack.c.bf16 %v749, %v748
    %v764 = vpack.c.bf16 %v751, %v750
    %v765 = vpack.c.bf16 %v753, %v752
    %v766 = vpack.c.bf16 %v755, %v754
    %v767 = vpack.c.bf16 %v757, %v756
    %v768 = vpack.c.bf16 %v759, %v758
    %v769 = vpack.c.bf16 %v761, %v760
    %v770 = vld [vmem:[#allocation3] sm:$0xf]
    %v771 = vld [vmem:[#allocation3 + $0x4] sm:$0xf]
    %v772 = vld [vmem:[#allocation3 + $0x8] sm:$0xf]
    %v773 = vld [vmem:[#allocation3 + $0xc] sm:$0xf]
    %v774 = vld [vmem:[#allocation3 + $0x10] sm:$0xf]
    %v775 = vld [vmem:[#allocation3 + $0x14] sm:$0xf]
    %v776 = vld [vmem:[#allocation3 + $0x18] sm:$0xf]
    %v777 = vld [vmem:[#allocation3 + $0x1c] sm:$0xf]
    %v778 = vld [vmem:[#allocation3 + $0x20] sm:$0xf]
    %v779 = vld [vmem:[#allocation3 + $0x24] sm:$0xf]
    %v780 = vld [vmem:[#allocation3 + $0x28] sm:$0xf]
    %v781 = vld [vmem:[#allocation3 + $0x2c] sm:$0xf]
    %v782 = vld [vmem:[#allocation3 + $0x30] sm:$0xf]
    %v783 = vld [vmem:[#allocation3 + $0x34] sm:$0xf]
    %v784 = vld [vmem:[#allocation3 + $0x38] sm:$0xf]
    %v785 = vld [vmem:[#allocation3 + $0x3c] sm:$0xf]
    %v786 = vld [vmem:[%s8] sm:$0x1]
    %v788 = vlaneseq
    %v789 = vshrl.u32 %v788, 7
    %v790 = vsub.s32 0, %v789
    %v791 = vrot.slane %v786, %v790
    %v809 = vunpack.c.l.b16 %v770
    %v810 = vunpack.c.l.b16 %v771
    %v811 = vunpack.c.l.b16 %v772
    %v812 = vunpack.c.l.b16 %v773
    %v813 = vunpack.c.l.b16 %v774
    %v814 = vunpack.c.l.b16 %v775
    %v815 = vunpack.c.l.b16 %v776
    %v816 = vunpack.c.l.b16 %v777
    %v817 = vunpack.c.l.b16 %v778
    %v818 = vunpack.c.l.b16 %v779
    %v819 = vunpack.c.l.b16 %v780
    %v820 = vunpack.c.l.b16 %v781
    %v821 = vunpack.c.l.b16 %v782
    %v822 = vunpack.c.l.b16 %v783
    %v823 = vunpack.c.l.b16 %v784
    %v824 = vunpack.c.l.b16 %v785
    %v825 = vpack.c.b16 %v810, %v809
    %v826 = vpack.c.b16 %v812, %v811
    %v827 = vpack.c.b16 %v814, %v813
    %v828 = vpack.c.b16 %v816, %v815
    %v829 = vpack.c.b16 %v818, %v817
    %v830 = vpack.c.b16 %v820, %v819
    %v831 = vpack.c.b16 %v822, %v821
    %v832 = vpack.c.b16 %v824, %v823
    %841 = vmatprep.subr.bf16.mxu0 0
    %842 = vmatpush1.bf16.msra.mxu0 %v832
    %843 = vmatprep.subr.bf16.mxu0 0
    %844 = vmatpush1.bf16.msra.mxu0 %v831
    %845 = vmatprep.subr.bf16.mxu0 0
    %846 = vmatpush1.bf16.msra.mxu0 %v830
    %847 = vmatprep.subr.bf16.mxu0 0
    %848 = vmatpush1.bf16.msra.mxu0 %v829
    %849 = vmatprep.subr.bf16.mxu0 0
    %850 = vmatpush1.bf16.msra.mxu0 %v828
    %851 = vmatprep.subr.bf16.mxu0 0
    %852 = vmatpush1.bf16.msra.mxu0 %v827
    %853 = vmatprep.subr.bf16.mxu0 0
    %854 = vmatpush1.bf16.msra.mxu0 %v826
    %855 = vmatprep.subr.bf16.mxu0 0
    %856 = vmatpush1.bf16.msra.mxu0 %v825
    %857 = vmatprep.subr.bf16.mxu0 0
    %858 = vmatpush2.bf16.msra.mxu0 0
    %859 = vmatprep.subr.bf16.mxu0 0
    %860 = vmatpush2.bf16.msra.mxu0 0
    %861 = vmatprep.subr.bf16.mxu0 0
    %862 = vmatpush2.bf16.msra.mxu0 0
    %863 = vmatprep.subr.bf16.mxu0 0
    %864 = vmatpush2.bf16.msra.mxu0 0
    %865 = vmatprep.subr.bf16.mxu0 0
    %866 = vmatpush2.bf16.msra.mxu0 0
    %867 = vmatprep.subr.bf16.mxu0 0
    %868 = vmatpush2.bf16.msra.mxu0 0
    %869 = vmatprep.subr.bf16.mxu0 0
    %870 = vmatpush2.bf16.msra.mxu0 0
    %871 = vmatprep.subr.bf16.mxu0 0
    %872 = vmatpush2.bf16.msra.mxu0 0
    %873 = vmatprep.mubr.bf16.mxu0 0
    %874 = vmatmul.mubr.bf16.gmra.mxu0 %v762
    %v875 = vpop.f32.mrf.mxu0
    %v876 = vadd.f32 %v791, %v875
    %v877 = vpop.f32.mrf.mxu0
    %v878 = vpop.f32.mrf.mxu0
    %v879 = vadd.f32 %v791, %v878
    %v880 = vpop.f32.mrf.mxu0
    %881 = vmatprep.mubr.bf16.mxu0 0
    %882 = vmatmul.mubr.bf16.gmra.mxu0 %v763
    %v883 = vpop.f32.mrf.mxu0
    %v884 = vadd.f32 %v791, %v883
    %v885 = vpop.f32.mrf.mxu0
    %v886 = vpop.f32.mrf.mxu0
    %v887 = vadd.f32 %v791, %v886
    %v888 = vpop.f32.mrf.mxu0
    %889 = vmatprep.mubr.bf16.mxu0 0
    %890 = vmatmul.mubr.bf16.gmra.mxu0 %v764
    %v891 = vpop.f32.mrf.mxu0
    %v892 = vadd.f32 %v791, %v891
    %v893 = vpop.f32.mrf.mxu0
    %v894 = vpop.f32.mrf.mxu0
    %v895 = vadd.f32 %v791, %v894
    %v896 = vpop.f32.mrf.mxu0
    %897 = vmatprep.mubr.bf16.mxu0 0
    %898 = vmatmul.mubr.bf16.gmra.mxu0 %v765
    %v899 = vpop.f32.mrf.mxu0
    %v900 = vadd.f32 %v791, %v899
    %v901 = vpop.f32.mrf.mxu0
    %v902 = vpop.f32.mrf.mxu0
    %v903 = vadd.f32 %v791, %v902
    %v904 = vpop.f32.mrf.mxu0
    %905 = vmatprep.mubr.bf16.mxu0 0
    %906 = vmatmul.mubr.bf16.gmra.mxu0 %v766
    %v907 = vpop.f32.mrf.mxu0
    %v908 = vadd.f32 %v791, %v907
    %v909 = vpop.f32.mrf.mxu0
    %v910 = vpop.f32.mrf.mxu0
    %v911 = vadd.f32 %v791, %v910
    %v912 = vpop.f32.mrf.mxu0
    %913 = vmatprep.mubr.bf16.mxu0 0
    %914 = vmatmul.mubr.bf16.gmra.mxu0 %v767
    %v915 = vpop.f32.mrf.mxu0
    %v916 = vadd.f32 %v791, %v915
    %v917 = vpop.f32.mrf.mxu0
    %v918 = vpop.f32.mrf.mxu0
    %v919 = vadd.f32 %v791, %v918
    %v920 = vpop.f32.mrf.mxu0
    %921 = vmatprep.mubr.bf16.mxu0 0
    %922 = vmatmul.mubr.bf16.gmra.mxu0 %v768
    %v923 = vpop.f32.mrf.mxu0
    %v924 = vadd.f32 %v791, %v923
    %v925 = vpop.f32.mrf.mxu0
    %v926 = vpop.f32.mrf.mxu0
    %v927 = vadd.f32 %v791, %v926
    %v928 = vpop.f32.mrf.mxu0
    %929 = vmatprep.mubr.bf16.mxu0 0
    %930 = vmatmul.mubr.bf16.gmra.mxu0 %v769
    %v931 = vpop.f32.mrf.mxu0
    %v932 = vadd.f32 %v791, %v931
    %v933 = vpop.f32.mrf.mxu0
    %v934 = vpop.f32.mrf.mxu0
    %v935 = vadd.f32 %v791, %v934
    %v936 = vpop.f32.mrf.mxu0
    %937 = vdwg.mxu0
    %v938 = vmax.f32 %v876, 0.0
    %v939 = vmax.f32 %v879, 0.0
    %v940 = vmax.f32 %v884, 0.0
    %v941 = vmax.f32 %v887, 0.0
    %v942 = vmax.f32 %v892, 0.0
    %v943 = vmax.f32 %v895, 0.0
    %v944 = vmax.f32 %v900, 0.0
    %v945 = vmax.f32 %v903, 0.0
    %v946 = vmax.f32 %v908, 0.0
    %v947 = vmax.f32 %v911, 0.0
    %v948 = vmax.f32 %v916, 0.0
    %v949 = vmax.f32 %v919, 0.0
    %v950 = vmax.f32 %v924, 0.0
    %v951 = vmax.f32 %v927, 0.0
    %v952 = vmax.f32 %v932, 0.0
    %v953 = vmax.f32 %v935, 0.0
    %v954 = vpack.c.bf16 %v939, %v938
    %v955 = vpack.c.bf16 %v941, %v940
    %v956 = vpack.c.bf16 %v943, %v942
    %v957 = vpack.c.bf16 %v945, %v944
    %v958 = vpack.c.bf16 %v947, %v946
    %v959 = vpack.c.bf16 %v949, %v948
    %v960 = vpack.c.bf16 %v951, %v950
    %v961 = vpack.c.bf16 %v953, %v952
    %v962 = vld [vmem:[#allocation6] sm:$0xf]
    %v963 = vld [vmem:[#allocation6 + $0x4] sm:$0xf]
    %v964 = vld [vmem:[#allocation6 + $0x8] sm:$0xf]
    %v965 = vld [vmem:[#allocation6 + $0xc] sm:$0xf]
    %v966 = vld [vmem:[#allocation6 + $0x10] sm:$0xf]
    %v967 = vld [vmem:[#allocation6 + $0x14] sm:$0xf]
    %v968 = vld [vmem:[#allocation6 + $0x18] sm:$0xf]
    %v969 = vld [vmem:[#allocation6 + $0x1c] sm:$0xf]
    %v970 = vld [vmem:[#allocation6 + $0x20] sm:$0xf]
    %v971 = vld [vmem:[#allocation6 + $0x24] sm:$0xf]
    %v972 = vld [vmem:[#allocation6 + $0x28] sm:$0xf]
    %v973 = vld [vmem:[#allocation6 + $0x2c] sm:$0xf]
    %v974 = vld [vmem:[#allocation6 + $0x30] sm:$0xf]
    %v975 = vld [vmem:[#allocation6 + $0x34] sm:$0xf]
    %v976 = vld [vmem:[#allocation6 + $0x38] sm:$0xf]
    %v977 = vld [vmem:[#allocation6 + $0x3c] sm:$0xf]
    %v978 = vld [vmem:[%s10] sm:$0x1]
    %v980 = vlaneseq
    %v981 = vshrl.u32 %v980, 7
    %v982 = vsub.s32 0, %v981
    %v983 = vrot.slane %v978, %v982
    %v1001 = vunpack.c.l.b16 %v962
    %v1002 = vunpack.c.l.b16 %v963
    %v1003 = vunpack.c.l.b16 %v964
    %v1004 = vunpack.c.l.b16 %v965
    %v1005 = vunpack.c.l.b16 %v966
    %v1006 = vunpack.c.l.b16 %v967
    %v1007 = vunpack.c.l.b16 %v968
    %v1008 = vunpack.c.l.b16 %v969
    %v1009 = vunpack.c.l.b16 %v970
    %v1010 = vunpack.c.l.b16 %v971
    %v1011 = vunpack.c.l.b16 %v972
    %v1012 = vunpack.c.l.b16 %v973
    %v1013 = vunpack.c.l.b16 %v974
    %v1014 = vunpack.c.l.b16 %v975
    %v1015 = vunpack.c.l.b16 %v976
    %v1016 = vunpack.c.l.b16 %v977
    %v1017 = vpack.c.b16 %v1002, %v1001
    %v1018 = vpack.c.b16 %v1004, %v1003
    %v1019 = vpack.c.b16 %v1006, %v1005
    %v1020 = vpack.c.b16 %v1008, %v1007
    %v1021 = vpack.c.b16 %v1010, %v1009
    %v1022 = vpack.c.b16 %v1012, %v1011
    %v1023 = vpack.c.b16 %v1014, %v1013
    %v1024 = vpack.c.b16 %v1016, %v1015
    %1033 = vmatprep.subr.bf16.mxu0 0
    %1034 = vmatpush1.bf16.msra.mxu0 %v1024
    %1035 = vmatprep.subr.bf16.mxu0 0
    %1036 = vmatpush1.bf16.msra.mxu0 %v1023
    %1037 = vmatprep.subr.bf16.mxu0 0
    %1038 = vmatpush1.bf16.msra.mxu0 %v1022
    %1039 = vmatprep.subr.bf16.mxu0 0
    %1040 = vmatpush1.bf16.msra.mxu0 %v1021
    %1041 = vmatprep.subr.bf16.mxu0 0
    %1042 = vmatpush1.bf16.msra.mxu0 %v1020
    %1043 = vmatprep.subr.bf16.mxu0 0
    %1044 = vmatpush1.bf16.msra.mxu0 %v1019
    %1045 = vmatprep.subr.bf16.mxu0 0
    %1046 = vmatpush1.bf16.msra.mxu0 %v1018
    %1047 = vmatprep.subr.bf16.mxu0 0
    %1048 = vmatpush1.bf16.msra.mxu0 %v1017
    %1049 = vmatprep.subr.bf16.mxu0 0
    %1050 = vmatpush2.bf16.msra.mxu0 0
    %1051 = vmatprep.subr.bf16.mxu0 0
    %1052 = vmatpush2.bf16.msra.mxu0 0
    %1053 = vmatprep.subr.bf16.mxu0 0
    %1054 = vmatpush2.bf16.msra.mxu0 0
    %1055 = vmatprep.subr.bf16.mxu0 0
    %1056 = vmatpush2.bf16.msra.mxu0 0
    %1057 = vmatprep.subr.bf16.mxu0 0
    %1058 = vmatpush2.bf16.msra.mxu0 0
    %1059 = vmatprep.subr.bf16.mxu0 0
    %1060 = vmatpush2.bf16.msra.mxu0 0
    %1061 = vmatprep.subr.bf16.mxu0 0
    %1062 = vmatpush2.bf16.msra.mxu0 0
    %1063 = vmatprep.subr.bf16.mxu0 0
    %1064 = vmatpush2.bf16.msra.mxu0 0
    %1065 = vmatprep.mubr.bf16.mxu0 0
    %1066 = vmatmul.mubr.bf16.gmra.mxu0 %v954
    %v1067 = vpop.f32.mrf.mxu0
    %v1068 = vadd.f32 %v983, %v1067
    %v1069 = vpop.f32.mrf.mxu0
    %v1070 = vpop.f32.mrf.mxu0
    %v1071 = vadd.f32 %v983, %v1070
    %v1072 = vpop.f32.mrf.mxu0
    %1073 = vmatprep.mubr.bf16.mxu0 0
    %1074 = vmatmul.mubr.bf16.gmra.mxu0 %v955
    %v1075 = vpop.f32.mrf.mxu0
    %v1076 = vadd.f32 %v983, %v1075
    %v1077 = vpop.f32.mrf.mxu0
    %v1078 = vpop.f32.mrf.mxu0
    %v1079 = vadd.f32 %v983, %v1078
    %v1080 = vpop.f32.mrf.mxu0
    %1081 = vmatprep.mubr.bf16.mxu0 0
    %1082 = vmatmul.mubr.bf16.gmra.mxu0 %v956
    %v1083 = vpop.f32.mrf.mxu0
    %v1084 = vadd.f32 %v983, %v1083
    %v1085 = vpop.f32.mrf.mxu0
    %v1086 = vpop.f32.mrf.mxu0
    %v1087 = vadd.f32 %v983, %v1086
    %v1088 = vpop.f32.mrf.mxu0
    %1089 = vmatprep.mubr.bf16.mxu0 0
    %1090 = vmatmul.mubr.bf16.gmra.mxu0 %v957
    %v1091 = vpop.f32.mrf.mxu0
    %v1092 = vadd.f32 %v983, %v1091
    %v1093 = vpop.f32.mrf.mxu0
    %v1094 = vpop.f32.mrf.mxu0
    %v1095 = vadd.f32 %v983, %v1094
    %v1096 = vpop.f32.mrf.mxu0
    %1097 = vmatprep.mubr.bf16.mxu0 0
    %1098 = vmatmul.mubr.bf16.gmra.mxu0 %v958
    %v1099 = vpop.f32.mrf.mxu0
    %v1100 = vadd.f32 %v983, %v1099
    %v1101 = vpop.f32.mrf.mxu0
    %v1102 = vpop.f32.mrf.mxu0
    %v1103 = vadd.f32 %v983, %v1102
    %v1104 = vpop.f32.mrf.mxu0
    %1105 = vmatprep.mubr.bf16.mxu0 0
    %1106 = vmatmul.mubr.bf16.gmra.mxu0 %v959
    %v1107 = vpop.f32.mrf.mxu0
    %v1108 = vadd.f32 %v983, %v1107
    %v1109 = vpop.f32.mrf.mxu0
    %v1110 = vpop.f32.mrf.mxu0
    %v1111 = vadd.f32 %v983, %v1110
    %v1112 = vpop.f32.mrf.mxu0
    %1113 = vmatprep.mubr.bf16.mxu0 0
    %1114 = vmatmul.mubr.bf16.gmra.mxu0 %v960
    %v1115 = vpop.f32.mrf.mxu0
    %v1116 = vadd.f32 %v983, %v1115
    %v1117 = vpop.f32.mrf.mxu0
    %v1118 = vpop.f32.mrf.mxu0
    %v1119 = vadd.f32 %v983, %v1118
    %v1120 = vpop.f32.mrf.mxu0
    %1121 = vmatprep.mubr.bf16.mxu0 0
    %1122 = vmatmul.mubr.bf16.gmra.mxu0 %v961
    %v1123 = vpop.f32.mrf.mxu0
    %v1124 = vadd.f32 %v983, %v1123
    %v1125 = vpop.f32.mrf.mxu0
    %v1126 = vpop.f32.mrf.mxu0
    %v1127 = vadd.f32 %v983, %v1126
    %v1128 = vpop.f32.mrf.mxu0
    %1129 = vdwg.mxu0
    %v1130 = vmax.f32 %v1068, 0.0
    %v1131 = vmax.f32 %v1071, 0.0
    %v1132 = vmax.f32 %v1076, 0.0
    %v1133 = vmax.f32 %v1079, 0.0
    %v1134 = vmax.f32 %v1084, 0.0
    %v1135 = vmax.f32 %v1087, 0.0
    %v1136 = vmax.f32 %v1092, 0.0
    %v1137 = vmax.f32 %v1095, 0.0
    %v1138 = vmax.f32 %v1100, 0.0
    %v1139 = vmax.f32 %v1103, 0.0
    %v1140 = vmax.f32 %v1108, 0.0
    %v1141 = vmax.f32 %v1111, 0.0
    %v1142 = vmax.f32 %v1116, 0.0
    %v1143 = vmax.f32 %v1119, 0.0
    %v1144 = vmax.f32 %v1124, 0.0
    %v1145 = vmax.f32 %v1127, 0.0
    %v1146 = vpack.c.bf16 %v1131, %v1130
    %v1147 = vpack.c.bf16 %v1133, %v1132
    %v1148 = vpack.c.bf16 %v1135, %v1134
    %v1149 = vpack.c.bf16 %v1137, %v1136
    %v1150 = vpack.c.bf16 %v1139, %v1138
    %v1151 = vpack.c.bf16 %v1141, %v1140
    %v1152 = vpack.c.bf16 %v1143, %v1142
    %v1153 = vpack.c.bf16 %v1145, %v1144
    %v1154 = vld [vmem:[%s11] sm:$0xf]
    %v1155 = vld [vmem:[%s11 + $0x4] sm:$0xf]
    %v1156 = vld [vmem:[%s11 + $0x8] sm:$0xf]
    %v1157 = vld [vmem:[%s11 + $0xc] sm:$0xf]
    %v1158 = vld [vmem:[%s11 + $0x10] sm:$0xf]
    %v1159 = vld [vmem:[%s11 + $0x14] sm:$0xf]
    %v1160 = vld [vmem:[%s11 + $0x18] sm:$0xf]
    %v1161 = vld [vmem:[%s11 + $0x1c] sm:$0xf]
    %v1162 = vld [vmem:[%s11 + $0x20] sm:$0xf]
    %v1163 = vld [vmem:[%s11 + $0x24] sm:$0xf]
    %v1164 = vld [vmem:[%s11 + $0x28] sm:$0xf]
    %v1165 = vld [vmem:[%s11 + $0x2c] sm:$0xf]
    %v1166 = vld [vmem:[%s11 + $0x30] sm:$0xf]
    %v1167 = vld [vmem:[%s11 + $0x34] sm:$0xf]
    %v1168 = vld [vmem:[%s11 + $0x38] sm:$0xf]
    %v1169 = vld [vmem:[%s11 + $0x3c] sm:$0xf]
    %v1170 = vld [vmem:[#allocation2] sm:$0x1]
    %v1172 = vlaneseq
    %v1173 = vshrl.u32 %v1172, 7
    %v1174 = vsub.s32 0, %v1173
    %v1175 = vrot.slane %v1170, %v1174
    %v1193 = vunpack.c.l.b16 %v1154
    %v1194 = vunpack.c.l.b16 %v1155
    %v1195 = vunpack.c.l.b16 %v1156
    %v1196 = vunpack.c.l.b16 %v1157
    %v1197 = vunpack.c.l.b16 %v1158
    %v1198 = vunpack.c.l.b16 %v1159
    %v1199 = vunpack.c.l.b16 %v1160
    %v1200 = vunpack.c.l.b16 %v1161
    %v1201 = vunpack.c.l.b16 %v1162
    %v1202 = vunpack.c.l.b16 %v1163
    %v1203 = vunpack.c.l.b16 %v1164
    %v1204 = vunpack.c.l.b16 %v1165
    %v1205 = vunpack.c.l.b16 %v1166
    %v1206 = vunpack.c.l.b16 %v1167
    %v1207 = vunpack.c.l.b16 %v1168
    %v1208 = vunpack.c.l.b16 %v1169
    %v1209 = vpack.c.b16 %v1194, %v1193
    %v1210 = vpack.c.b16 %v1196, %v1195
    %v1211 = vpack.c.b16 %v1198, %v1197
    %v1212 = vpack.c.b16 %v1200, %v1199
    %v1213 = vpack.c.b16 %v1202, %v1201
    %v1214 = vpack.c.b16 %v1204, %v1203
    %v1215 = vpack.c.b16 %v1206, %v1205
    %v1216 = vpack.c.b16 %v1208, %v1207
    %1225 = vmatprep.subr.bf16.mxu0 0
    %1226 = vmatpush1.bf16.msra.mxu0 %v1216
    %1227 = vmatprep.subr.bf16.mxu0 0
    %1228 = vmatpush1.bf16.msra.mxu0 %v1215
    %1229 = vmatprep.subr.bf16.mxu0 0
    %1230 = vmatpush1.bf16.msra.mxu0 %v1214
    %1231 = vmatprep.subr.bf16.mxu0 0
    %1232 = vmatpush1.bf16.msra.mxu0 %v1213
    %1233 = vmatprep.subr.bf16.mxu0 0
    %1234 = vmatpush1.bf16.msra.mxu0 %v1212
    %1235 = vmatprep.subr.bf16.mxu0 0
    %1236 = vmatpush1.bf16.msra.mxu0 %v1211
    %1237 = vmatprep.subr.bf16.mxu0 0
    %1238 = vmatpush1.bf16.msra.mxu0 %v1210
    %1239 = vmatprep.subr.bf16.mxu0 0
    %1240 = vmatpush1.bf16.msra.mxu0 %v1209
    %1241 = vmatprep.subr.bf16.mxu0 0
    %1242 = vmatpush2.bf16.msra.mxu0 0
    %1243 = vmatprep.subr.bf16.mxu0 0
    %1244 = vmatpush2.bf16.msra.mxu0 0
    %1245 = vmatprep.subr.bf16.mxu0 0
    %1246 = vmatpush2.bf16.msra.mxu0 0
    %1247 = vmatprep.subr.bf16.mxu0 0
    %1248 = vmatpush2.bf16.msra.mxu0 0
    %1249 = vmatprep.subr.bf16.mxu0 0
    %1250 = vmatpush2.bf16.msra.mxu0 0
    %1251 = vmatprep.subr.bf16.mxu0 0
    %1252 = vmatpush2.bf16.msra.mxu0 0
    %1253 = vmatprep.subr.bf16.mxu0 0
    %1254 = vmatpush2.bf16.msra.mxu0 0
    %1255 = vmatprep.subr.bf16.mxu0 0
    %1256 = vmatpush2.bf16.msra.mxu0 0
    %1257 = vmatprep.mubr.bf16.mxu0 0
    %1258 = vmatmul.mubr.bf16.gmra.mxu0 %v1146
    %v1259 = vpop.f32.mrf.mxu0
    %v1260 = vadd.f32 %v1175, %v1259
    %v1261 = vpop.f32.mrf.mxu0
    %v1262 = vpop.f32.mrf.mxu0
    %v1263 = vadd.f32 %v1175, %v1262
    %v1264 = vpop.f32.mrf.mxu0
    %1265 = vmatprep.mubr.bf16.mxu0 0
    %1266 = vmatmul.mubr.bf16.gmra.mxu0 %v1147
    %v1267 = vpop.f32.mrf.mxu0
    %v1268 = vadd.f32 %v1175, %v1267
    %v1269 = vpop.f32.mrf.mxu0
    %v1270 = vpop.f32.mrf.mxu0
    %v1271 = vadd.f32 %v1175, %v1270
    %v1272 = vpop.f32.mrf.mxu0
    %1273 = vmatprep.mubr.bf16.mxu0 0
    %1274 = vmatmul.mubr.bf16.gmra.mxu0 %v1148
    %v1275 = vpop.f32.mrf.mxu0
    %v1276 = vadd.f32 %v1175, %v1275
    %v1277 = vpop.f32.mrf.mxu0
    %v1278 = vpop.f32.mrf.mxu0
    %v1279 = vadd.f32 %v1175, %v1278
    %v1280 = vpop.f32.mrf.mxu0
    %1281 = vmatprep.mubr.bf16.mxu0 0
    %1282 = vmatmul.mubr.bf16.gmra.mxu0 %v1149
    %v1283 = vpop.f32.mrf.mxu0
    %v1284 = vadd.f32 %v1175, %v1283
    %v1285 = vpop.f32.mrf.mxu0
    %v1286 = vpop.f32.mrf.mxu0
    %v1287 = vadd.f32 %v1175, %v1286
    %v1288 = vpop.f32.mrf.mxu0
    %1289 = vmatprep.mubr.bf16.mxu0 0
    %1290 = vmatmul.mubr.bf16.gmra.mxu0 %v1150
    %v1291 = vpop.f32.mrf.mxu0
    %v1292 = vadd.f32 %v1175, %v1291
    %v1293 = vpop.f32.mrf.mxu0
    %v1294 = vpop.f32.mrf.mxu0
    %v1295 = vadd.f32 %v1175, %v1294
    %v1296 = vpop.f32.mrf.mxu0
    %1297 = vmatprep.mubr.bf16.mxu0 0
    %1298 = vmatmul.mubr.bf16.gmra.mxu0 %v1151
    %v1299 = vpop.f32.mrf.mxu0
    %v1300 = vadd.f32 %v1175, %v1299
    %v1301 = vpop.f32.mrf.mxu0
    %v1302 = vpop.f32.mrf.mxu0
    %v1303 = vadd.f32 %v1175, %v1302
    %v1304 = vpop.f32.mrf.mxu0
    %1305 = vmatprep.mubr.bf16.mxu0 0
    %1306 = vmatmul.mubr.bf16.gmra.mxu0 %v1152
    %v1307 = vpop.f32.mrf.mxu0
    %v1308 = vadd.f32 %v1175, %v1307
    %v1309 = vpop.f32.mrf.mxu0
    %v1310 = vpop.f32.mrf.mxu0
    %v1311 = vadd.f32 %v1175, %v1310
    %v1312 = vpop.f32.mrf.mxu0
    %1313 = vmatprep.mubr.bf16.mxu0 0
    %1314 = vmatmul.mubr.bf16.gmra.mxu0 %v1153
    %v1315 = vpop.f32.mrf.mxu0
    %v1316 = vadd.f32 %v1175, %v1315
    %v1317 = vpop.f32.mrf.mxu0
    %v1318 = vpop.f32.mrf.mxu0
    %v1319 = vadd.f32 %v1175, %v1318
    %v1320 = vpop.f32.mrf.mxu0
    %1321 = vdwg.mxu0
    %v1322 = vmax.f32 %v1260, 0.0
    %v1323 = vmax.f32 %v1263, 0.0
    %v1324 = vmax.f32 %v1268, 0.0
    %v1325 = vmax.f32 %v1271, 0.0
    %v1326 = vmax.f32 %v1276, 0.0
    %v1327 = vmax.f32 %v1279, 0.0
    %v1328 = vmax.f32 %v1284, 0.0
    %v1329 = vmax.f32 %v1287, 0.0
    %v1330 = vmax.f32 %v1292, 0.0
    %v1331 = vmax.f32 %v1295, 0.0
    %v1332 = vmax.f32 %v1300, 0.0
    %v1333 = vmax.f32 %v1303, 0.0
    %v1334 = vmax.f32 %v1308, 0.0
    %v1335 = vmax.f32 %v1311, 0.0
    %v1336 = vmax.f32 %v1316, 0.0
    %v1337 = vmax.f32 %v1319, 0.0
    %1338 = vxpose.xlu0.b32.start [1/16] %v1322, 128
    %1339 = vxpose.xlu0.b32.cont [2/16] %v1323, 128
    %1340 = vxpose.xlu0.b32.cont [3/16] %v1324, 128
    %1341 = vxpose.xlu0.b32.cont [4/16] %v1325, 128
    %1342 = vxpose.xlu0.b32.cont [5/16] %v1326, 128
    %1343 = vxpose.xlu0.b32.cont [6/16] %v1327, 128
    %1344 = vxpose.xlu0.b32.cont [7/16] %v1328, 128
    %1345 = vxpose.xlu0.b32.cont [8/16] %v1329, 128
    %1346 = vxpose.xlu0.b32.cont [9/16] %v1330, 128
    %1347 = vxpose.xlu0.b32.cont [10/16] %v1331, 128
    %1348 = vxpose.xlu0.b32.cont [11/16] %v1332, 128
    %1349 = vxpose.xlu0.b32.cont [12/16] %v1333, 128
    %1350 = vxpose.xlu0.b32.cont [13/16] %v1334, 128
    %1351 = vxpose.xlu0.b32.cont [14/16] %v1335, 128
    %1352 = vxpose.xlu0.b32.cont [15/16] %v1336, 128
    %1353 = vxpose.xlu0.b32.end [16/16] %v1337, 128
    %v1354 = vpop.trf.xlu0
    %v1355 = vpop.trf.xlu0
    %v1356 = vpop.trf.xlu0
    %v1357 = vpop.trf.xlu0
    %v1358 = vpop.trf.xlu0
    %v1359 = vpop.trf.xlu0
    %v1360 = vpop.trf.xlu0
    %v1361 = vpop.trf.xlu0
    %v1362 = vpop.trf.xlu0
    %v1363 = vpop.trf.xlu0
    %v1364 = vpop.trf.xlu0
    %v1365 = vpop.trf.xlu0
    %v1366 = vpop.trf.xlu0
    %v1367 = vpop.trf.xlu0
    %v1368 = vpop.trf.xlu0
    %v1369 = vpop.trf.xlu0
    %1370 = vst [vmem:[#allocation8] sm:$0x1] %v1354
    // Predicated region
    $region62: #{tpu_custom_call.1} parent=1 // pred_check
      _
    $region63: #{tpu_custom_call.1} parent=1 // pred_check_branch
      %1372 = sbr.rel (0) target = $region65
    $region64: #{tpu_custom_call.1} parent=1 // pred_region
      %s1374 = ssub.s32 16, 16
      %1375 = vsyncadd [#allocation5], %s1374
      %s1377 = sshll.u32 [#allocation8], 4
      %s1378 = int_to_ptr.vmem [resolvable:$true] %s1377
      %1380 = dma.vmem_to_hbm [thread:$0]  %s1378, 16, %s13, [#allocation5]
    $region65: #{tpu_custom_call.1} parent=1 // pred_fallthru
      _
    // Predicated region
    $region66: #{tpu_custom_call.1} parent=1 // pred_check
      _
    $region67: #{tpu_custom_call.1} parent=1 // pred_check_branch
      %1382 = sbr.rel (0) target = $region69
    $region68: #{tpu_custom_call.1} parent=1 // pred_region
      %1383 = dma.done [#allocation5], 16
    $region69: #{tpu_custom_call.1} parent=1 // pred_fallthru
      _
    %1384 = vsyncpa [#allocation4], 1
    %1385 = vsyncpa [#allocation7], 1
    %1386 = vsyncpa [#allocation5], 1

</llo_original>
